<compile_context>
chip_gen: v5e
topology: v5e:2x2
jax: 0.10.0
libtpu: 0.0.40
codegen_flags: <defaults>
</compile_context>

<pallas_src>
import functools

import jax
import jax.numpy as jnp
from jax.experimental import pallas as pl
from jax.experimental.pallas import tpu as pltpu


def _linear_bias_kernel(x_ref, w_ref, b_ref, o_ref):
    # bf16 x bf16 on the MXU with f32 accumulation; f32 bias add.
    acc = jnp.dot(
        x_ref[...].astype(jnp.bfloat16),
        w_ref[...],
        preferred_element_type=jnp.float32,
    )
    o_ref[...] = (acc + b_ref[...]).astype(o_ref.dtype)


def _const_block_spec(shape):
    """BlockSpec for a grid-invariant block; single-buffer it when supported."""
    index_map = lambda i: (0,) * len(shape)
    try:
        return pl.BlockSpec(shape, index_map, pipeline_mode=pl.Buffered(1))
    except (TypeError, AttributeError):
        # Older jax without pipeline_mode / Buffered: fall back to default.
        return pl.BlockSpec(shape, index_map)


@functools.partial(jax.jit, static_argnames=("tm",))
def linear_pallas(x, w_t_bf16, b, *, tm=256):
    """out = x @ w_t + b  with x:(M,K) f32, w_t:(K,N) bf16, b:(1,N) f32.

    Full-K / full-N blocks (no reduction grid); only M is tiled. The last M
    block may be ragged — Pallas masks the out-of-bounds output writes.
    """
    M, K = x.shape
    K2, N = w_t_bf16.shape
    assert K == K2 and b.shape == (1, N)

    if M <= tm:
        tm_eff = M            # single full-batch block (full-dim block is legal)
        num_blocks = 1
    else:
        tm_eff = tm
        num_blocks = pl.cdiv(M, tm)

    # Megacore ("parallel") duplicates the resident weight DMA per TensorCore;
    # only shard when there are enough M tiles for x traffic to dominate.
    dim_sem = ("parallel",) if num_blocks >= 4 else ("arbitrary",)

    return pl.pallas_call(
        _linear_bias_kernel,
        out_shape=jax.ShapeDtypeStruct((M, N), jnp.float32),
        grid_spec=pltpu.PrefetchScalarGridSpec(
            num_scalar_prefetch=0,
            grid=(num_blocks,),
            in_specs=[
                pl.BlockSpec((tm_eff, K), lambda i: (i, 0)),  # x rows (f32, cast in-kernel)
                _const_block_spec((K, N)),                    # bf16 weight, single-buffered
                _const_block_spec((1, N)),                    # f32 bias, single-buffered
            ],
            out_specs=pl.BlockSpec((tm_eff, N), lambda i: (i, 0)),
        ),
        compiler_params=pltpu.CompilerParams(
            dimension_semantics=dim_sem,
        ),
    )(x, w_t_bf16, b)


class DeepCORALPallas:
    """JAX/Pallas port of the PyTorch DeepCORAL module."""

    def __init__(self, num_classes=128, in_features=4096, key=jax.random.PRNGKey(42)):
        kw, kb = jax.random.split(key)
        # weight.data.normal_(0, 0.005); PyTorch Linear weight is (out, in)
        w = 0.005 * jax.random.normal(kw, (num_classes, in_features), jnp.float32)
        # PyTorch default bias init: U(-1/sqrt(in), 1/sqrt(in))
        bound = 1.0 / (in_features ** 0.5)
        b = jax.random.uniform(
            kb, (num_classes,), jnp.float32, minval=-bound, maxval=bound
        )
        # HBM-bound kernel: store the classifier weight in bf16 to halve the
        # dominant weight stream; bias / accumulation stay f32.
        # TODO(synk): on v7x the weight could additionally be quantized to fp8.
        self.w_t = jnp.asarray(w.T).astype(jnp.bfloat16)   # (in, out)
        self.b = jnp.asarray(b).reshape(1, -1)              # (1, out) f32

    def __call__(self, source):
        tmp_mmd = source
        out = linear_pallas(source, self.w_t, self.b)
        return out, tmp_mmd


if __name__ == "__main__":
    key = jax.random.PRNGKey(0)
    batch, in_features, num_classes = 8, 4096, 128

    x = jax.random.normal(key, (batch, in_features), jnp.float32)

    model = DeepCORALPallas(num_classes=num_classes, in_features=in_features)
    out, tmp_mmd = model(x)
    jax.block_until_ready((out, tmp_mmd))

    # Reference (bf16-cast inputs, f32 accumulation) — matches kernel math.
    w_f32 = model.w_t.astype(jnp.float32)
    ref = x.astype(jnp.bfloat16).astype(jnp.float32) @ w_f32 + model.b
    assert out.shape == (batch, num_classes)
    assert tmp_mmd.shape == x.shape
    assert jnp.allclose(out, ref, atol=1e-2, rtol=1e-2)
    assert jnp.array_equal(tmp_mmd, x)

    # Exercise the ragged multi-tile path (M > tm, non-multiple of tm, "arbitrary").
    x_big = jax.random.normal(jax.random.PRNGKey(1), (300, in_features), jnp.float32)
    out_big = linear_pallas(x_big, model.w_t, model.b)
    jax.block_until_ready(out_big)
    ref_big = x_big.astype(jnp.bfloat16).astype(jnp.float32) @ w_f32 + model.b
    assert out_big.shape == (300, num_classes)
    assert jnp.allclose(out_big, ref_big, atol=1e-2, rtol=1e-2)

    # Exercise the multi-tile "parallel" path (>= 4 blocks, ragged last block).
    x_huge = jax.random.normal(jax.random.PRNGKey(2), (1050, in_features), jnp.float32)
    out_huge = linear_pallas(x_huge, model.w_t, model.b)
    jax.block_until_ready(out_huge)
    ref_huge = x_huge.astype(jnp.bfloat16).astype(jnp.float32) @ w_f32 + model.b
    assert out_huge.shape == (1050, num_classes)
    assert jnp.allclose(out_huge, ref_huge, atol=1e-2, rtol=1e-2)

    print("KERNEL_OK")
</pallas_src>

<mosaic_0001>
module attributes {stable_mosaic.version = 11 : i64} {
  func.func @_linear_bias_kernel(%arg0: i32, %arg1: memref<8x4096xf32, #tpu.memory_space<vmem>>, %arg2: memref<4096x128xbf16, #tpu.memory_space<vmem>>, %arg3: memref<1x128xf32, #tpu.memory_space<vmem>>, %arg4: memref<8x128xf32, #tpu.memory_space<vmem>>) attributes {dimension_semantics = [#tpu.dimension_semantics<arbitrary>], iteration_bounds = array<i64: 1>, scalar_prefetch = 0 : i64, scratch_operands = 0 : i64, tpu.core_type = #tpu.core_type<tc>, window_params = [{transform_indices = @transform_0, window_bounds = array<i64: 8, 4096>}, {pipeline_mode = #tpu.pipeline_mode<synchronous>, transform_indices = @transform_1, window_bounds = array<i64: 4096, 128>}, {pipeline_mode = #tpu.pipeline_mode<synchronous>, transform_indices = @transform_2, window_bounds = array<i64: 1, 128>}, {transform_indices = @transform_3, window_bounds = array<i64: 8, 128>}]} {
    %c0 = arith.constant 0 : index
    %c0_0 = arith.constant 0 : index
    %0 = vector.load %arg1[%c0, %c0_0] : memref<8x4096xf32, #tpu.memory_space<vmem>>, vector<8x4096xf32>
    %1 = arith.truncf %0 : vector<8x4096xf32> to vector<8x4096xbf16>
    %c0_1 = arith.constant 0 : index
    %c0_2 = arith.constant 0 : index
    %2 = vector.load %arg2[%c0_1, %c0_2] : memref<4096x128xbf16, #tpu.memory_space<vmem>>, vector<4096x128xbf16>
    %cst = arith.constant dense<0.000000e+00> : vector<8x128xf32>
    %3 = tpu.matmul %1, %2, %cst {dimension_numbers = #tpu.dot_dimension_numbers<[1], [0], [0], [1], [0, 0, 1, 1], [], []>} : vector<8x4096xbf16>, vector<4096x128xbf16>, vector<8x128xf32> -> vector<8x128xf32>
    %c0_3 = arith.constant 0 : index
    %c0_4 = arith.constant 0 : index
    %4 = vector.load %arg3[%c0_3, %c0_4] : memref<1x128xf32, #tpu.memory_space<vmem>>, vector<1x128xf32>
    %5 = vector.broadcast %4 : vector<1x128xf32> to vector<8x128xf32>
    %6 = arith.addf %3, %5 : vector<8x128xf32>
    %c0_5 = arith.constant 0 : index
    %c0_6 = arith.constant 0 : index
    %7 = vector.load %arg4[%c0_5, %c0_6] : memref<8x128xf32, #tpu.memory_space<vmem>>, vector<8x128xf32>
    tpu.vector_store %arg4[%c0_5, %c0_6], %6 {strides = array<i32>} : memref<8x128xf32, #tpu.memory_space<vmem>>, vector<8x128xf32>,
    return
  }
  func.func @transform_0(%arg0: i32) -> (i32, i32) {
    %c0_i32 = arith.constant 0 : i32
    %c0_i32_0 = arith.constant 0 : i32
    return %arg0, %c0_i32 : i32, i32
  }
  func.func @transform_1(%arg0: i32) -> (i32, i32) {
    %c0_i32 = arith.constant 0 : i32
    %c0_i32_0 = arith.constant 0 : i32
    %c0_i32_1 = arith.constant 0 : i32
    return %c0_i32, %c0_i32_0 : i32, i32
  }
  func.func @transform_2(%arg0: i32) -> (i32, i32) {
    %c0_i32 = arith.constant 0 : i32
    %c0_i32_0 = arith.constant 0 : i32
    %c0_i32_1 = arith.constant 0 : i32
    return %c0_i32, %c0_i32_0 : i32, i32
  }
  func.func @transform_3(%arg0: i32) -> (i32, i32) {
    %c0_i32 = arith.constant 0 : i32
    %c0_i32_0 = arith.constant 0 : i32
    return %arg0, %c0_i32 : i32, i32
  }
}

</mosaic_0001>

<llo_original>
// kernel: linear_pallas.1
$region0: #{linear_pallas.1}
  #allocation0 [shape = 'u32[]', space=smem, size = 0x4, offset = 0x4, fixed_abs, tag = 'smem constant byte address 0x4 - core index']
  #allocation1 [shape = 'u32[72,128]{1,0:T(1,128)}', space=vmem, size = 0x9000, scoped, tag = 'internal scratch']
  %s0 = inlined_call_operand.hbm [shape: f32[8,4096], index: 0, kind: input, shape index: {}]
  %s1 = inlined_call_operand.hbm [shape: bf16[4096,128], index: 1, kind: input, shape index: {}]
  %s2 = inlined_call_operand.vmem [shape: f32[1,128], index: 2, kind: input, shape index: {}]
  %s3 = inlined_call_operand.hbm [shape: f32[8,128], index: 3, kind: output, shape index: {}]
  %s4 = sld [smem:[#allocation0]]
  $region30: #{linear_pallas.1} parent=0
    _
  %s6 = ssub.s32 1, %s4
  %s7 = scalar_select 0, %s6, %s4
  $region1: #{linear_pallas.1} parent=0
    #allocation2 [shape = 'u8[131072]{0}', space=vmem, size = 0x20000, scoped, tag = 'input window, operand 0, single buffered']
    #allocation3 [shape = 's32[1]{0}', space=sflag, size = 0x4, scoped, tag = 'scoped memory for linear_pallas.1']
    #allocation4 [shape = 's32[1]{0}', space=sflag, size = 0x4, scoped, tag = 'scoped memory for linear_pallas.1']
    #allocation5 [shape = 'u8[1048576]{0}', space=vmem, size = 0x100000, scoped, tag = 'input window, operand 1, single buffered']
    #allocation6 [shape = 's32[1]{0}', space=sflag, size = 0x4, scoped, tag = 'scoped memory for linear_pallas.1']
    #allocation7 [shape = 'u8[4096]{0}', space=vmem, size = 0x1000, scoped, tag = 'output window, operand 0, single buffered']
    %8 = vsyncpa [#allocation3], 0
    %9 = vsyncpa [#allocation6], 0
    %10 = vsyncpa [#allocation4], 0
    // Predicated region
    $region2: #{linear_pallas.1} parent=1 // pred_check
      _
    $region3: #{linear_pallas.1} parent=1 // pred_check_branch
      %12 = sbr.rel (0) target = $region5
    $region4: #{linear_pallas.1} parent=1 // pred_region
      %14 = vsyncadd [#allocation3], 0
      %s16 = sshll.u32 %s0, 4
      %s17 = int_to_ptr.hbm [resolvable:$true] %s16
      %s18 = sshll.u32 [#allocation2], 4
      %s19 = int_to_ptr.vmem [resolvable:$true] %s18
      %21 = dma.hbm_to_vmem [thread:$0]  %s17, 4096, %s19, [#allocation3]
    $region5: #{linear_pallas.1} parent=1 // pred_fallthru
      _
    // Predicated region
    $region6: #{linear_pallas.1} parent=1 // pred_check
      _
    $region7: #{linear_pallas.1} parent=1 // pred_check_branch
      %23 = sbr.rel (0) target = $region9
    $region8: #{linear_pallas.1} parent=1 // pred_region
      %25 = vsyncadd [#allocation6], 0
      %s26 = sshll.u32 %s1, 4
      %s27 = int_to_ptr.hbm [resolvable:$true] %s26
      %s28 = sshll.u32 [#allocation5], 4
      %s29 = int_to_ptr.vmem [resolvable:$true] %s28
      %34 = dma.hbm_to_vmem [thread:$0]  %s27, 32768, %s29, [#allocation6], 64, 64, 4
    $region9: #{linear_pallas.1} parent=1 // pred_fallthru
      _
    // Predicated region
    $region10: #{linear_pallas.1} parent=1 // pred_check
      _
    $region11: #{linear_pallas.1} parent=1 // pred_check_branch
      %36 = sbr.rel (0) target = $region13
    $region12: #{linear_pallas.1} parent=1 // pred_region
      _
    $region13: #{linear_pallas.1} parent=1 // pred_fallthru
      _
    // Predicated region
    $region14: #{linear_pallas.1} parent=1 // pred_check
      _
    $region15: #{linear_pallas.1} parent=1 // pred_check_branch
      %38 = sbr.rel (0) target = $region17
    $region16: #{linear_pallas.1} parent=1 // pred_region
      %40 = dma.done [#allocation3], 4096
    $region17: #{linear_pallas.1} parent=1 // pred_fallthru
      _
    // Predicated region
    $region18: #{linear_pallas.1} parent=1 // pred_check
      _
    $region19: #{linear_pallas.1} parent=1 // pred_check_branch
      %42 = sbr.rel (0) target = $region21
    $region20: #{linear_pallas.1} parent=1 // pred_region
      %44 = dma.done [#allocation6], 32768
    $region21: #{linear_pallas.1} parent=1 // pred_fallthru
      _
    %v45 = vld [vmem:[#allocation2] sm:$0xff]
    %v46 = vld [vmem:[#allocation2 + $0x8] sm:$0xff]
    %v47 = vld [vmem:[#allocation2 + $0x10] sm:$0xff]
    %v48 = vld [vmem:[#allocation2 + $0x18] sm:$0xff]
    %v49 = vld [vmem:[#allocation2 + $0x20] sm:$0xff]
    %v50 = vld [vmem:[#allocation2 + $0x28] sm:$0xff]
    %v51 = vld [vmem:[#allocation2 + $0x30] sm:$0xff]
    %v52 = vld [vmem:[#allocation2 + $0x38] sm:$0xff]
    %v53 = vld [vmem:[#allocation2 + $0x40] sm:$0xff]
    %v54 = vld [vmem:[#allocation2 + $0x48] sm:$0xff]
    %v55 = vld [vmem:[#allocation2 + $0x50] sm:$0xff]
    %v56 = vld [vmem:[#allocation2 + $0x58] sm:$0xff]
    %v57 = vld [vmem:[#allocation2 + $0x60] sm:$0xff]
    %v58 = vld [vmem:[#allocation2 + $0x68] sm:$0xff]
    %v59 = vld [vmem:[#allocation2 + $0x70] sm:$0xff]
    %v60 = vld [vmem:[#allocation2 + $0x78] sm:$0xff]
    %v61 = vld [vmem:[#allocation2 + $0x80] sm:$0xff]
    %v62 = vld [vmem:[#allocation2 + $0x88] sm:$0xff]
    %v63 = vld [vmem:[#allocation2 + $0x90] sm:$0xff]
    %v64 = vld [vmem:[#allocation2 + $0x98] sm:$0xff]
    %v65 = vld [vmem:[#allocation2 + $0xa0] sm:$0xff]
    %v66 = vld [vmem:[#allocation2 + $0xa8] sm:$0xff]
    %v67 = vld [vmem:[#allocation2 + $0xb0] sm:$0xff]
    %v68 = vld [vmem:[#allocation2 + $0xb8] sm:$0xff]
    %v69 = vld [vmem:[#allocation2 + $0xc0] sm:$0xff]
    %v70 = vld [vmem:[#allocation2 + $0xc8] sm:$0xff]
    %v71 = vld [vmem:[#allocation2 + $0xd0] sm:$0xff]
    %v72 = vld [vmem:[#allocation2 + $0xd8] sm:$0xff]
    %v73 = vld [vmem:[#allocation2 + $0xe0] sm:$0xff]
    %v74 = vld [vmem:[#allocation2 + $0xe8] sm:$0xff]
    %v75 = vld [vmem:[#allocation2 + $0xf0] sm:$0xff]
    %v76 = vld [vmem:[#allocation2 + $0xf8] sm:$0xff]
    %v77 = vpack.c.bf16 %v45, %v45
    %v78 = vpack.c.bf16 %v46, %v46
    %v79 = vpack.c.bf16 %v47, %v47
    %v80 = vpack.c.bf16 %v48, %v48
    %v81 = vpack.c.bf16 %v49, %v49
    %v82 = vpack.c.bf16 %v50, %v50
    %v83 = vpack.c.bf16 %v51, %v51
    %v84 = vpack.c.bf16 %v52, %v52
    %v85 = vpack.c.bf16 %v53, %v53
    %v86 = vpack.c.bf16 %v54, %v54
    %v87 = vpack.c.bf16 %v55, %v55
    %v88 = vpack.c.bf16 %v56, %v56
    %v89 = vpack.c.bf16 %v57, %v57
    %v90 = vpack.c.bf16 %v58, %v58
    %v91 = vpack.c.bf16 %v59, %v59
    %v92 = vpack.c.bf16 %v60, %v60
    %v93 = vpack.c.bf16 %v61, %v61
    %v94 = vpack.c.bf16 %v62, %v62
    %v95 = vpack.c.bf16 %v63, %v63
    %v96 = vpack.c.bf16 %v64, %v64
    %v97 = vpack.c.bf16 %v65, %v65
    %v98 = vpack.c.bf16 %v66, %v66
    %v99 = vpack.c.bf16 %v67, %v67
    %v100 = vpack.c.bf16 %v68, %v68
    %v101 = vpack.c.bf16 %v69, %v69
    %v102 = vpack.c.bf16 %v70, %v70
    %v103 = vpack.c.bf16 %v71, %v71
    %v104 = vpack.c.bf16 %v72, %v72
    %v105 = vpack.c.bf16 %v73, %v73
    %v106 = vpack.c.bf16 %v74, %v74
    %v107 = vpack.c.bf16 %v75, %v75
    %v108 = vpack.c.bf16 %v76, %v76
    %v109 = vld [vmem:[#allocation5] sm:$0xf]
    %v110 = vld [vmem:[#allocation5 + $0x4] sm:$0xf]
    %v111 = vld [vmem:[#allocation5 + $0x8] sm:$0xf]
    %v112 = vld [vmem:[#allocation5 + $0xc] sm:$0xf]
    %v113 = vld [vmem:[#allocation5 + $0x10] sm:$0xf]
    %v114 = vld [vmem:[#allocation5 + $0x14] sm:$0xf]
    %v115 = vld [vmem:[#allocation5 + $0x18] sm:$0xf]
    %v116 = vld [vmem:[#allocation5 + $0x1c] sm:$0xf]
    %v117 = vld [vmem:[#allocation5 + $0x20] sm:$0xf]
    %v118 = vld [vmem:[#allocation5 + $0x24] sm:$0xf]
    %v119 = vld [vmem:[#allocation5 + $0x28] sm:$0xf]
    %v120 = vld [vmem:[#allocation5 + $0x2c] sm:$0xf]
    %v121 = vld [vmem:[#allocation5 + $0x30] sm:$0xf]
    %v122 = vld [vmem:[#allocation5 + $0x34] sm:$0xf]
    %v123 = vld [vmem:[#allocation5 + $0x38] sm:$0xf]
    %v124 = vld [vmem:[#allocation5 + $0x3c] sm:$0xf]
    %v125 = vld [vmem:[#allocation5 + $0x40] sm:$0xf]
    %v126 = vld [vmem:[#allocation5 + $0x44] sm:$0xf]
    %v127 = vld [vmem:[#allocation5 + $0x48] sm:$0xf]
    %v128 = vld [vmem:[#allocation5 + $0x4c] sm:$0xf]
    %v129 = vld [vmem:[#allocation5 + $0x50] sm:$0xf]
    %v130 = vld [vmem:[#allocation5 + $0x54] sm:$0xf]
    %v131 = vld [vmem:[#allocation5 + $0x58] sm:$0xf]
    %v132 = vld [vmem:[#allocation5 + $0x5c] sm:$0xf]
    %v133 = vld [vmem:[#allocation5 + $0x60] sm:$0xf]
    %v134 = vld [vmem:[#allocation5 + $0x64] sm:$0xf]
    %v135 = vld [vmem:[#allocation5 + $0x68] sm:$0xf]
    %v136 = vld [vmem:[#allocation5 + $0x6c] sm:$0xf]
    %v137 = vld [vmem:[#allocation5 + $0x70] sm:$0xf]
    %v138 = vld [vmem:[#allocation5 + $0x74] sm:$0xf]
    %v139 = vld [vmem:[#allocation5 + $0x78] sm:$0xf]
    %v140 = vld [vmem:[#allocation5 + $0x7c] sm:$0xf]
    %v141 = vld [vmem:[#allocation5 + $0x80] sm:$0xf]
    %v142 = vld [vmem:[#allocation5 + $0x84] sm:$0xf]
    %v143 = vld [vmem:[#allocation5 + $0x88] sm:$0xf]
    %v144 = vld [vmem:[#allocation5 + $0x8c] sm:$0xf]
    %v145 = vld [vmem:[#allocation5 + $0x90] sm:$0xf]
    %v146 = vld [vmem:[#allocation5 + $0x94] sm:$0xf]
    %v147 = vld [vmem:[#allocation5 + $0x98] sm:$0xf]
    %v148 = vld [vmem:[#allocation5 + $0x9c] sm:$0xf]
    %v149 = vld [vmem:[#allocation5 + $0xa0] sm:$0xf]
    %v150 = vld [vmem:[#allocation5 + $0xa4] sm:$0xf]
    %v151 = vld [vmem:[#allocation5 + $0xa8] sm:$0xf]
    %v152 = vld [vmem:[#allocation5 + $0xac] sm:$0xf]
    %v153 = vld [vmem:[#allocation5 + $0xb0] sm:$0xf]
    %v154 = vld [vmem:[#allocation5 + $0xb4] sm:$0xf]
    %v155 = vld [vmem:[#allocation5 + $0xb8] sm:$0xf]
    %v156 = vld [vmem:[#allocation5 + $0xbc] sm:$0xf]
    %v157 = vld [vmem:[#allocation5 + $0xc0] sm:$0xf]
    %v158 = vld [vmem:[#allocation5 + $0xc4] sm:$0xf]
    %v159 = vld [vmem:[#allocation5 + $0xc8] sm:$0xf]
    %v160 = vld [vmem:[#allocation5 + $0xcc] sm:$0xf]
    %v161 = vld [vmem:[#allocation5 + $0xd0] sm:$0xf]
    %v162 = vld [vmem:[#allocation5 + $0xd4] sm:$0xf]
    %v163 = vld [vmem:[#allocation5 + $0xd8] sm:$0xf]
    %v164 = vld [vmem:[#allocation5 + $0xdc] sm:$0xf]
    %v165 = vld [vmem:[#allocation5 + $0xe0] sm:$0xf]
    %v166 = vld [vmem:[#allocation5 + $0xe4] sm:$0xf]
    %v167 = vld [vmem:[#allocation5 + $0xe8] sm:$0xf]
    %v168 = vld [vmem:[#allocation5 + $0xec] sm:$0xf]
    %v169 = vld [vmem:[#allocation5 + $0xf0] sm:$0xf]
    %v170 = vld [vmem:[#allocation5 + $0xf4] sm:$0xf]
    %v171 = vld [vmem:[#allocation5 + $0xf8] sm:$0xf]
    %v172 = vld [vmem:[#allocation5 + $0xfc] sm:$0xf]
    %v173 = vld [vmem:[#allocation5 + $0x100] sm:$0xf]
    %v174 = vld [vmem:[#allocation5 + $0x104] sm:$0xf]
    %v175 = vld [vmem:[#allocation5 + $0x108] sm:$0xf]
    %v176 = vld [vmem:[#allocation5 + $0x10c] sm:$0xf]
    %v177 = vld [vmem:[#allocation5 + $0x110] sm:$0xf]
    %v178 = vld [vmem:[#allocation5 + $0x114] sm:$0xf]
    %v179 = vld [vmem:[#allocation5 + $0x118] sm:$0xf]
    %v180 = vld [vmem:[#allocation5 + $0x11c] sm:$0xf]
    %v181 = vld [vmem:[#allocation5 + $0x120] sm:$0xf]
    %v182 = vld [vmem:[#allocation5 + $0x124] sm:$0xf]
    %v183 = vld [vmem:[#allocation5 + $0x128] sm:$0xf]
    %v184 = vld [vmem:[#allocation5 + $0x12c] sm:$0xf]
    %v185 = vld [vmem:[#allocation5 + $0x130] sm:$0xf]
    %v186 = vld [vmem:[#allocation5 + $0x134] sm:$0xf]
    %v187 = vld [vmem:[#allocation5 + $0x138] sm:$0xf]
    %v188 = vld [vmem:[#allocation5 + $0x13c] sm:$0xf]
    %v189 = vld [vmem:[#allocation5 + $0x140] sm:$0xf]
    %v190 = vld [vmem:[#allocation5 + $0x144] sm:$0xf]
    %v191 = vld [vmem:[#allocation5 + $0x148] sm:$0xf]
    %v192 = vld [vmem:[#allocation5 + $0x14c] sm:$0xf]
    %v193 = vld [vmem:[#allocation5 + $0x150] sm:$0xf]
    %v194 = vld [vmem:[#allocation5 + $0x154] sm:$0xf]
    %v195 = vld [vmem:[#allocation5 + $0x158] sm:$0xf]
    %v196 = vld [vmem:[#allocation5 + $0x15c] sm:$0xf]
    %v197 = vld [vmem:[#allocation5 + $0x160] sm:$0xf]
    %v198 = vld [vmem:[#allocation5 + $0x164] sm:$0xf]
    %v199 = vld [vmem:[#allocation5 + $0x168] sm:$0xf]
    %v200 = vld [vmem:[#allocation5 + $0x16c] sm:$0xf]
    %v201 = vld [vmem:[#allocation5 + $0x170] sm:$0xf]
    %v202 = vld [vmem:[#allocation5 + $0x174] sm:$0xf]
    %v203 = vld [vmem:[#allocation5 + $0x178] sm:$0xf]
    %v204 = vld [vmem:[#allocation5 + $0x17c] sm:$0xf]
    %v205 = vld [vmem:[#allocation5 + $0x180] sm:$0xf]
    %v206 = vld [vmem:[#allocation5 + $0x184] sm:$0xf]
    %v207 = vld [vmem:[#allocation5 + $0x188] sm:$0xf]
    %v208 = vld [vmem:[#allocation5 + $0x18c] sm:$0xf]
    %v209 = vld [vmem:[#allocation5 + $0x190] sm:$0xf]
    %v210 = vld [vmem:[#allocation5 + $0x194] sm:$0xf]
    %v211 = vld [vmem:[#allocation5 + $0x198] sm:$0xf]
    %v212 = vld [vmem:[#allocation5 + $0x19c] sm:$0xf]
    %v213 = vld [vmem:[#allocation5 + $0x1a0] sm:$0xf]
    %v214 = vld [vmem:[#allocation5 + $0x1a4] sm:$0xf]
    %v215 = vld [vmem:[#allocation5 + $0x1a8] sm:$0xf]
    %v216 = vld [vmem:[#allocation5 + $0x1ac] sm:$0xf]
    %v217 = vld [vmem:[#allocation5 + $0x1b0] sm:$0xf]
    %v218 = vld [vmem:[#allocation5 + $0x1b4] sm:$0xf]
    %v219 = vld [vmem:[#allocation5 + $0x1b8] sm:$0xf]
    %v220 = vld [vmem:[#allocation5 + $0x1bc] sm:$0xf]
    %v221 = vld [vmem:[#allocation5 + $0x1c0] sm:$0xf]
    %v222 = vld [vmem:[#allocation5 + $0x1c4] sm:$0xf]
    %v223 = vld [vmem:[#allocation5 + $0x1c8] sm:$0xf]
    %v224 = vld [vmem:[#allocation5 + $0x1cc] sm:$0xf]
    %v225 = vld [vmem:[#allocation5 + $0x1d0] sm:$0xf]
    %v226 = vld [vmem:[#allocation5 + $0x1d4] sm:$0xf]
    %v227 = vld [vmem:[#allocation5 + $0x1d8] sm:$0xf]
    %v228 = vld [vmem:[#allocation5 + $0x1dc] sm:$0xf]
    %v229 = vld [vmem:[#allocation5 + $0x1e0] sm:$0xf]
    %v230 = vld [vmem:[#allocation5 + $0x1e4] sm:$0xf]
    %v231 = vld [vmem:[#allocation5 + $0x1e8] sm:$0xf]
    %v232 = vld [vmem:[#allocation5 + $0x1ec] sm:$0xf]
    %v233 = vld [vmem:[#allocation5 + $0x1f0] sm:$0xf]
    %v234 = vld [vmem:[#allocation5 + $0x1f4] sm:$0xf]
    %v235 = vld [vmem:[#allocation5 + $0x1f8] sm:$0xf]
    %v236 = vld [vmem:[#allocation5 + $0x1fc] sm:$0xf]
    %v237 = vld [vmem:[#allocation5 + $0x200] sm:$0xf]
    %v238 = vld [vmem:[#allocation5 + $0x204] sm:$0xf]
    %v239 = vld [vmem:[#allocation5 + $0x208] sm:$0xf]
    %v240 = vld [vmem:[#allocation5 + $0x20c] sm:$0xf]
    %v241 = vld [vmem:[#allocation5 + $0x210] sm:$0xf]
    %v242 = vld [vmem:[#allocation5 + $0x214] sm:$0xf]
    %v243 = vld [vmem:[#allocation5 + $0x218] sm:$0xf]
    %v244 = vld [vmem:[#allocation5 + $0x21c] sm:$0xf]
    %v245 = vld [vmem:[#allocation5 + $0x220] sm:$0xf]
    %v246 = vld [vmem:[#allocation5 + $0x224] sm:$0xf]
    %v247 = vld [vmem:[#allocation5 + $0x228] sm:$0xf]
    %v248 = vld [vmem:[#allocation5 + $0x22c] sm:$0xf]
    %v249 = vld [vmem:[#allocation5 + $0x230] sm:$0xf]
    %v250 = vld [vmem:[#allocation5 + $0x234] sm:$0xf]
    %v251 = vld [vmem:[#allocation5 + $0x238] sm:$0xf]
    %v252 = vld [vmem:[#allocation5 + $0x23c] sm:$0xf]
    %v253 = vld [vmem:[#allocation5 + $0x240] sm:$0xf]
    %v254 = vld [vmem:[#allocation5 + $0x244] sm:$0xf]
    %v255 = vld [vmem:[#allocation5 + $0x248] sm:$0xf]
    %v256 = vld [vmem:[#allocation5 + $0x24c] sm:$0xf]
    %v257 = vld [vmem:[#allocation5 + $0x250] sm:$0xf]
    %v258 = vld [vmem:[#allocation5 + $0x254] sm:$0xf]
    %v259 = vld [vmem:[#allocation5 + $0x258] sm:$0xf]
    %v260 = vld [vmem:[#allocation5 + $0x25c] sm:$0xf]
    %v261 = vld [vmem:[#allocation5 + $0x260] sm:$0xf]
    %v262 = vld [vmem:[#allocation5 + $0x264] sm:$0xf]
    %v263 = vld [vmem:[#allocation5 + $0x268] sm:$0xf]
    %v264 = vld [vmem:[#allocation5 + $0x26c] sm:$0xf]
    %v265 = vld [vmem:[#allocation5 + $0x270] sm:$0xf]
    %v266 = vld [vmem:[#allocation5 + $0x274] sm:$0xf]
    %v267 = vld [vmem:[#allocation5 + $0x278] sm:$0xf]
    %v268 = vld [vmem:[#allocation5 + $0x27c] sm:$0xf]
    %v269 = vld [vmem:[#allocation5 + $0x280] sm:$0xf]
    %v270 = vld [vmem:[#allocation5 + $0x284] sm:$0xf]
    %v271 = vld [vmem:[#allocation5 + $0x288] sm:$0xf]
    %v272 = vld [vmem:[#allocation5 + $0x28c] sm:$0xf]
    %v273 = vld [vmem:[#allocation5 + $0x290] sm:$0xf]
    %v274 = vld [vmem:[#allocation5 + $0x294] sm:$0xf]
    %v275 = vld [vmem:[#allocation5 + $0x298] sm:$0xf]
    %v276 = vld [vmem:[#allocation5 + $0x29c] sm:$0xf]
    %v277 = vld [vmem:[#allocation5 + $0x2a0] sm:$0xf]
    %v278 = vld [vmem:[#allocation5 + $0x2a4] sm:$0xf]
    %v279 = vld [vmem:[#allocation5 + $0x2a8] sm:$0xf]
    %v280 = vld [vmem:[#allocation5 + $0x2ac] sm:$0xf]
    %v281 = vld [vmem:[#allocation5 + $0x2b0] sm:$0xf]
    %v282 = vld [vmem:[#allocation5 + $0x2b4] sm:$0xf]
    %v283 = vld [vmem:[#allocation5 + $0x2b8] sm:$0xf]
    %v284 = vld [vmem:[#allocation5 + $0x2bc] sm:$0xf]
    %v285 = vld [vmem:[#allocation5 + $0x2c0] sm:$0xf]
    %v286 = vld [vmem:[#allocation5 + $0x2c4] sm:$0xf]
    %v287 = vld [vmem:[#allocation5 + $0x2c8] sm:$0xf]
    %v288 = vld [vmem:[#allocation5 + $0x2cc] sm:$0xf]
    %v289 = vld [vmem:[#allocation5 + $0x2d0] sm:$0xf]
    %v290 = vld [vmem:[#allocation5 + $0x2d4] sm:$0xf]
    %v291 = vld [vmem:[#allocation5 + $0x2d8] sm:$0xf]
    %v292 = vld [vmem:[#allocation5 + $0x2dc] sm:$0xf]
    %v293 = vld [vmem:[#allocation5 + $0x2e0] sm:$0xf]
    %v294 = vld [vmem:[#allocation5 + $0x2e4] sm:$0xf]
    %v295 = vld [vmem:[#allocation5 + $0x2e8] sm:$0xf]
    %v296 = vld [vmem:[#allocation5 + $0x2ec] sm:$0xf]
    %v297 = vld [vmem:[#allocation5 + $0x2f0] sm:$0xf]
    %v298 = vld [vmem:[#allocation5 + $0x2f4] sm:$0xf]
    %v299 = vld [vmem:[#allocation5 + $0x2f8] sm:$0xf]
    %v300 = vld [vmem:[#allocation5 + $0x2fc] sm:$0xf]
    %v301 = vld [vmem:[#allocation5 + $0x300] sm:$0xf]
    %v302 = vld [vmem:[#allocation5 + $0x304] sm:$0xf]
    %v303 = vld [vmem:[#allocation5 + $0x308] sm:$0xf]
    %v304 = vld [vmem:[#allocation5 + $0x30c] sm:$0xf]
    %v305 = vld [vmem:[#allocation5 + $0x310] sm:$0xf]
    %v306 = vld [vmem:[#allocation5 + $0x314] sm:$0xf]
    %v307 = vld [vmem:[#allocation5 + $0x318] sm:$0xf]
    %v308 = vld [vmem:[#allocation5 + $0x31c] sm:$0xf]
    %v309 = vld [vmem:[#allocation5 + $0x320] sm:$0xf]
    %v310 = vld [vmem:[#allocation5 + $0x324] sm:$0xf]
    %v311 = vld [vmem:[#allocation5 + $0x328] sm:$0xf]
    %v312 = vld [vmem:[#allocation5 + $0x32c] sm:$0xf]
    %v313 = vld [vmem:[#allocation5 + $0x330] sm:$0xf]
    %v314 = vld [vmem:[#allocation5 + $0x334] sm:$0xf]
    %v315 = vld [vmem:[#allocation5 + $0x338] sm:$0xf]
    %v316 = vld [vmem:[#allocation5 + $0x33c] sm:$0xf]
    %v317 = vld [vmem:[#allocation5 + $0x340] sm:$0xf]
    %v318 = vld [vmem:[#allocation5 + $0x344] sm:$0xf]
    %v319 = vld [vmem:[#allocation5 + $0x348] sm:$0xf]
    %v320 = vld [vmem:[#allocation5 + $0x34c] sm:$0xf]
    %v321 = vld [vmem:[#allocation5 + $0x350] sm:$0xf]
    %v322 = vld [vmem:[#allocation5 + $0x354] sm:$0xf]
    %v323 = vld [vmem:[#allocation5 + $0x358] sm:$0xf]
    %v324 = vld [vmem:[#allocation5 + $0x35c] sm:$0xf]
    %v325 = vld [vmem:[#allocation5 + $0x360] sm:$0xf]
    %v326 = vld [vmem:[#allocation5 + $0x364] sm:$0xf]
    %v327 = vld [vmem:[#allocation5 + $0x368] sm:$0xf]
    %v328 = vld [vmem:[#allocation5 + $0x36c] sm:$0xf]
    %v329 = vld [vmem:[#allocation5 + $0x370] sm:$0xf]
    %v330 = vld [vmem:[#allocation5 + $0x374] sm:$0xf]
    %v331 = vld [vmem:[#allocation5 + $0x378] sm:$0xf]
    %v332 = vld [vmem:[#allocation5 + $0x37c] sm:$0xf]
    %v333 = vld [vmem:[#allocation5 + $0x380] sm:$0xf]
    %v334 = vld [vmem:[#allocation5 + $0x384] sm:$0xf]
    %v335 = vld [vmem:[#allocation5 + $0x388] sm:$0xf]
    %v336 = vld [vmem:[#allocation5 + $0x38c] sm:$0xf]
    %v337 = vld [vmem:[#allocation5 + $0x390] sm:$0xf]
    %v338 = vld [vmem:[#allocation5 + $0x394] sm:$0xf]
    %v339 = vld [vmem:[#allocation5 + $0x398] sm:$0xf]
    %v340 = vld [vmem:[#allocation5 + $0x39c] sm:$0xf]
    %v341 = vld [vmem:[#allocation5 + $0x3a0] sm:$0xf]
    %v342 = vld [vmem:[#allocation5 + $0x3a4] sm:$0xf]
    %v343 = vld [vmem:[#allocation5 + $0x3a8] sm:$0xf]
    %v344 = vld [vmem:[#allocation5 + $0x3ac] sm:$0xf]
    %v345 = vld [vmem:[#allocation5 + $0x3b0] sm:$0xf]
    %v346 = vld [vmem:[#allocation5 + $0x3b4] sm:$0xf]
    %v347 = vld [vmem:[#allocation5 + $0x3b8] sm:$0xf]
    %v348 = vld [vmem:[#allocation5 + $0x3bc] sm:$0xf]
    %v349 = vld [vmem:[#allocation5 + $0x3c0] sm:$0xf]
    %v350 = vld [vmem:[#allocation5 + $0x3c4] sm:$0xf]
    %v351 = vld [vmem:[#allocation5 + $0x3c8] sm:$0xf]
    %v352 = vld [vmem:[#allocation5 + $0x3cc] sm:$0xf]
    %v353 = vld [vmem:[#allocation5 + $0x3d0] sm:$0xf]
    %v354 = vld [vmem:[#allocation5 + $0x3d4] sm:$0xf]
    %v355 = vld [vmem:[#allocation5 + $0x3d8] sm:$0xf]
    %v356 = vld [vmem:[#allocation5 + $0x3dc] sm:$0xf]
    %v357 = vld [vmem:[#allocation5 + $0x3e0] sm:$0xf]
    %v358 = vld [vmem:[#allocation5 + $0x3e4] sm:$0xf]
    %v359 = vld [vmem:[#allocation5 + $0x3e8] sm:$0xf]
    %v360 = vld [vmem:[#allocation5 + $0x3ec] sm:$0xf]
    %v361 = vld [vmem:[#allocation5 + $0x3f0] sm:$0xf]
    %v362 = vld [vmem:[#allocation5 + $0x3f4] sm:$0xf]
    %v363 = vld [vmem:[#allocation5 + $0x3f8] sm:$0xf]
    %v364 = vld [vmem:[#allocation5 + $0x3fc] sm:$0xf]
    %v365 = vld [vmem:[#allocation5 + $0x400] sm:$0xf]
    %v366 = vld [vmem:[#allocation5 + $0x404] sm:$0xf]
    %v367 = vld [vmem:[#allocation5 + $0x408] sm:$0xf]
    %v368 = vld [vmem:[#allocation5 + $0x40c] sm:$0xf]
    %v369 = vld [vmem:[#allocation5 + $0x410] sm:$0xf]
    %v370 = vld [vmem:[#allocation5 + $0x414] sm:$0xf]
    %v371 = vld [vmem:[#allocation5 + $0x418] sm:$0xf]
    %v372 = vld [vmem:[#allocation5 + $0x41c] sm:$0xf]
    %v373 = vld [vmem:[#allocation5 + $0x420] sm:$0xf]
    %v374 = vld [vmem:[#allocation5 + $0x424] sm:$0xf]
    %v375 = vld [vmem:[#allocation5 + $0x428] sm:$0xf]
    %v376 = vld [vmem:[#allocation5 + $0x42c] sm:$0xf]
    %v377 = vld [vmem:[#allocation5 + $0x430] sm:$0xf]
    %v378 = vld [vmem:[#allocation5 + $0x434] sm:$0xf]
    %v379 = vld [vmem:[#allocation5 + $0x438] sm:$0xf]
    %v380 = vld [vmem:[#allocation5 + $0x43c] sm:$0xf]
    %v381 = vld [vmem:[#allocation5 + $0x440] sm:$0xf]
    %v382 = vld [vmem:[#allocation5 + $0x444] sm:$0xf]
    %v383 = vld [vmem:[#allocation5 + $0x448] sm:$0xf]
    %v384 = vld [vmem:[#allocation5 + $0x44c] sm:$0xf]
    %v385 = vld [vmem:[#allocation5 + $0x450] sm:$0xf]
    %v386 = vld [vmem:[#allocation5 + $0x454] sm:$0xf]
    %v387 = vld [vmem:[#allocation5 + $0x458] sm:$0xf]
    %v388 = vld [vmem:[#allocation5 + $0x45c] sm:$0xf]
    %v389 = vld [vmem:[#allocation5 + $0x460] sm:$0xf]
    %v390 = vld [vmem:[#allocation5 + $0x464] sm:$0xf]
    %v391 = vld [vmem:[#allocation5 + $0x468] sm:$0xf]
    %v392 = vld [vmem:[#allocation5 + $0x46c] sm:$0xf]
    %v393 = vld [vmem:[#allocation5 + $0x470] sm:$0xf]
    %v394 = vld [vmem:[#allocation5 + $0x474] sm:$0xf]
    %v395 = vld [vmem:[#allocation5 + $0x478] sm:$0xf]
    %v396 = vld [vmem:[#allocation5 + $0x47c] sm:$0xf]
    %v397 = vld [vmem:[#allocation5 + $0x480] sm:$0xf]
    %v398 = vld [vmem:[#allocation5 + $0x484] sm:$0xf]
    %v399 = vld [vmem:[#allocation5 + $0x488] sm:$0xf]
    %v400 = vld [vmem:[#allocation5 + $0x48c] sm:$0xf]
    %v401 = vld [vmem:[#allocation5 + $0x490] sm:$0xf]
    %v402 = vld [vmem:[#allocation5 + $0x494] sm:$0xf]
    %v403 = vld [vmem:[#allocation5 + $0x498] sm:$0xf]
    %v404 = vld [vmem:[#allocation5 + $0x49c] sm:$0xf]
    %v405 = vld [vmem:[#allocation5 + $0x4a0] sm:$0xf]
    %v406 = vld [vmem:[#allocation5 + $0x4a4] sm:$0xf]
    %v407 = vld [vmem:[#allocation5 + $0x4a8] sm:$0xf]
    %v408 = vld [vmem:[#allocation5 + $0x4ac] sm:$0xf]
    %v409 = vld [vmem:[#allocation5 + $0x4b0] sm:$0xf]
    %v410 = vld [vmem:[#allocation5 + $0x4b4] sm:$0xf]
    %v411 = vld [vmem:[#allocation5 + $0x4b8] sm:$0xf]
    %v412 = vld [vmem:[#allocation5 + $0x4bc] sm:$0xf]
    %v413 = vld [vmem:[#allocation5 + $0x4c0] sm:$0xf]
    %v414 = vld [vmem:[#allocation5 + $0x4c4] sm:$0xf]
    %v415 = vld [vmem:[#allocation5 + $0x4c8] sm:$0xf]
    %v416 = vld [vmem:[#allocation5 + $0x4cc] sm:$0xf]
    %v417 = vld [vmem:[#allocation5 + $0x4d0] sm:$0xf]
    %v418 = vld [vmem:[#allocation5 + $0x4d4] sm:$0xf]
    %v419 = vld [vmem:[#allocation5 + $0x4d8] sm:$0xf]
    %v420 = vld [vmem:[#allocation5 + $0x4dc] sm:$0xf]
    %v421 = vld [vmem:[#allocation5 + $0x4e0] sm:$0xf]
    %v422 = vld [vmem:[#allocation5 + $0x4e4] sm:$0xf]
    %v423 = vld [vmem:[#allocation5 + $0x4e8] sm:$0xf]
    %v424 = vld [vmem:[#allocation5 + $0x4ec] sm:$0xf]
    %v425 = vld [vmem:[#allocation5 + $0x4f0] sm:$0xf]
    %v426 = vld [vmem:[#allocation5 + $0x4f4] sm:$0xf]
    %v427 = vld [vmem:[#allocation5 + $0x4f8] sm:$0xf]
    %v428 = vld [vmem:[#allocation5 + $0x4fc] sm:$0xf]
    %v429 = vld [vmem:[#allocation5 + $0x500] sm:$0xf]
    %v430 = vld [vmem:[#allocation5 + $0x504] sm:$0xf]
    %v431 = vld [vmem:[#allocation5 + $0x508] sm:$0xf]
    %v432 = vld [vmem:[#allocation5 + $0x50c] sm:$0xf]
    %v433 = vld [vmem:[#allocation5 + $0x510] sm:$0xf]
    %v434 = vld [vmem:[#allocation5 + $0x514] sm:$0xf]
    %v435 = vld [vmem:[#allocation5 + $0x518] sm:$0xf]
    %v436 = vld [vmem:[#allocation5 + $0x51c] sm:$0xf]
    %v437 = vld [vmem:[#allocation5 + $0x520] sm:$0xf]
    %v438 = vld [vmem:[#allocation5 + $0x524] sm:$0xf]
    %v439 = vld [vmem:[#allocation5 + $0x528] sm:$0xf]
    %v440 = vld [vmem:[#allocation5 + $0x52c] sm:$0xf]
    %v441 = vld [vmem:[#allocation5 + $0x530] sm:$0xf]
    %v442 = vld [vmem:[#allocation5 + $0x534] sm:$0xf]
    %v443 = vld [vmem:[#allocation5 + $0x538] sm:$0xf]
    %v444 = vld [vmem:[#allocation5 + $0x53c] sm:$0xf]
    %v445 = vld [vmem:[#allocation5 + $0x540] sm:$0xf]
    %v446 = vld [vmem:[#allocation5 + $0x544] sm:$0xf]
    %v447 = vld [vmem:[#allocation5 + $0x548] sm:$0xf]
    %v448 = vld [vmem:[#allocation5 + $0x54c] sm:$0xf]
    %v449 = vld [vmem:[#allocation5 + $0x550] sm:$0xf]
    %v450 = vld [vmem:[#allocation5 + $0x554] sm:$0xf]
    %v451 = vld [vmem:[#allocation5 + $0x558] sm:$0xf]
    %v452 = vld [vmem:[#allocation5 + $0x55c] sm:$0xf]
    %v453 = vld [vmem:[#allocation5 + $0x560] sm:$0xf]
    %v454 = vld [vmem:[#allocation5 + $0x564] sm:$0xf]
    %v455 = vld [vmem:[#allocation5 + $0x568] sm:$0xf]
    %v456 = vld [vmem:[#allocation5 + $0x56c] sm:$0xf]
    %v457 = vld [vmem:[#allocation5 + $0x570] sm:$0xf]
    %v458 = vld [vmem:[#allocation5 + $0x574] sm:$0xf]
    %v459 = vld [vmem:[#allocation5 + $0x578] sm:$0xf]
    %v460 = vld [vmem:[#allocation5 + $0x57c] sm:$0xf]
    %v461 = vld [vmem:[#allocation5 + $0x580] sm:$0xf]
    %v462 = vld [vmem:[#allocation5 + $0x584] sm:$0xf]
    %v463 = vld [vmem:[#allocation5 + $0x588] sm:$0xf]
    %v464 = vld [vmem:[#allocation5 + $0x58c] sm:$0xf]
    %v465 = vld [vmem:[#allocation5 + $0x590] sm:$0xf]
    %v466 = vld [vmem:[#allocation5 + $0x594] sm:$0xf]
    %v467 = vld [vmem:[#allocation5 + $0x598] sm:$0xf]
    %v468 = vld [vmem:[#allocation5 + $0x59c] sm:$0xf]
    %v469 = vld [vmem:[#allocation5 + $0x5a0] sm:$0xf]
    %v470 = vld [vmem:[#allocation5 + $0x5a4] sm:$0xf]
    %v471 = vld [vmem:[#allocation5 + $0x5a8] sm:$0xf]
    %v472 = vld [vmem:[#allocation5 + $0x5ac] sm:$0xf]
    %v473 = vld [vmem:[#allocation5 + $0x5b0] sm:$0xf]
    %v474 = vld [vmem:[#allocation5 + $0x5b4] sm:$0xf]
    %v475 = vld [vmem:[#allocation5 + $0x5b8] sm:$0xf]
    %v476 = vld [vmem:[#allocation5 + $0x5bc] sm:$0xf]
    %v477 = vld [vmem:[#allocation5 + $0x5c0] sm:$0xf]
    %v478 = vld [vmem:[#allocation5 + $0x5c4] sm:$0xf]
    %v479 = vld [vmem:[#allocation5 + $0x5c8] sm:$0xf]
    %v480 = vld [vmem:[#allocation5 + $0x5cc] sm:$0xf]
    %v481 = vld [vmem:[#allocation5 + $0x5d0] sm:$0xf]
    %v482 = vld [vmem:[#allocation5 + $0x5d4] sm:$0xf]
    %v483 = vld [vmem:[#allocation5 + $0x5d8] sm:$0xf]
    %v484 = vld [vmem:[#allocation5 + $0x5dc] sm:$0xf]
    %v485 = vld [vmem:[#allocation5 + $0x5e0] sm:$0xf]
    %v486 = vld [vmem:[#allocation5 + $0x5e4] sm:$0xf]
    %v487 = vld [vmem:[#allocation5 + $0x5e8] sm:$0xf]
    %v488 = vld [vmem:[#allocation5 + $0x5ec] sm:$0xf]
    %v489 = vld [vmem:[#allocation5 + $0x5f0] sm:$0xf]
    %v490 = vld [vmem:[#allocation5 + $0x5f4] sm:$0xf]
    %v491 = vld [vmem:[#allocation5 + $0x5f8] sm:$0xf]
    %v492 = vld [vmem:[#allocation5 + $0x5fc] sm:$0xf]
    %v493 = vld [vmem:[#allocation5 + $0x600] sm:$0xf]
    %v494 = vld [vmem:[#allocation5 + $0x604] sm:$0xf]
    %v495 = vld [vmem:[#allocation5 + $0x608] sm:$0xf]
    %v496 = vld [vmem:[#allocation5 + $0x60c] sm:$0xf]
    %v497 = vld [vmem:[#allocation5 + $0x610] sm:$0xf]
    %v498 = vld [vmem:[#allocation5 + $0x614] sm:$0xf]
    %v499 = vld [vmem:[#allocation5 + $0x618] sm:$0xf]
    %v500 = vld [vmem:[#allocation5 + $0x61c] sm:$0xf]
    %v501 = vld [vmem:[#allocation5 + $0x620] sm:$0xf]
    %v502 = vld [vmem:[#allocation5 + $0x624] sm:$0xf]
    %v503 = vld [vmem:[#allocation5 + $0x628] sm:$0xf]
    %v504 = vld [vmem:[#allocation5 + $0x62c] sm:$0xf]
    %v505 = vld [vmem:[#allocation5 + $0x630] sm:$0xf]
    %v506 = vld [vmem:[#allocation5 + $0x634] sm:$0xf]
    %v507 = vld [vmem:[#allocation5 + $0x638] sm:$0xf]
    %v508 = vld [vmem:[#allocation5 + $0x63c] sm:$0xf]
    %v509 = vld [vmem:[#allocation5 + $0x640] sm:$0xf]
    %v510 = vld [vmem:[#allocation5 + $0x644] sm:$0xf]
    %v511 = vld [vmem:[#allocation5 + $0x648] sm:$0xf]
    %v512 = vld [vmem:[#allocation5 + $0x64c] sm:$0xf]
    %v513 = vld [vmem:[#allocation5 + $0x650] sm:$0xf]
    %v514 = vld [vmem:[#allocation5 + $0x654] sm:$0xf]
    %v515 = vld [vmem:[#allocation5 + $0x658] sm:$0xf]
    %v516 = vld [vmem:[#allocation5 + $0x65c] sm:$0xf]
    %v517 = vld [vmem:[#allocation5 + $0x660] sm:$0xf]
    %v518 = vld [vmem:[#allocation5 + $0x664] sm:$0xf]
    %v519 = vld [vmem:[#allocation5 + $0x668] sm:$0xf]
    %v520 = vld [vmem:[#allocation5 + $0x66c] sm:$0xf]
    %v521 = vld [vmem:[#allocation5 + $0x670] sm:$0xf]
    %v522 = vld [vmem:[#allocation5 + $0x674] sm:$0xf]
    %v523 = vld [vmem:[#allocation5 + $0x678] sm:$0xf]
    %v524 = vld [vmem:[#allocation5 + $0x67c] sm:$0xf]
    %v525 = vld [vmem:[#allocation5 + $0x680] sm:$0xf]
    %v526 = vld [vmem:[#allocation5 + $0x684] sm:$0xf]
    %v527 = vld [vmem:[#allocation5 + $0x688] sm:$0xf]
    %v528 = vld [vmem:[#allocation5 + $0x68c] sm:$0xf]
    %v529 = vld [vmem:[#allocation5 + $0x690] sm:$0xf]
    %v530 = vld [vmem:[#allocation5 + $0x694] sm:$0xf]
    %v531 = vld [vmem:[#allocation5 + $0x698] sm:$0xf]
    %v532 = vld [vmem:[#allocation5 + $0x69c] sm:$0xf]
    %v533 = vld [vmem:[#allocation5 + $0x6a0] sm:$0xf]
    %v534 = vld [vmem:[#allocation5 + $0x6a4] sm:$0xf]
    %v535 = vld [vmem:[#allocation5 + $0x6a8] sm:$0xf]
    %v536 = vld [vmem:[#allocation5 + $0x6ac] sm:$0xf]
    %v537 = vld [vmem:[#allocation5 + $0x6b0] sm:$0xf]
    %v538 = vld [vmem:[#allocation5 + $0x6b4] sm:$0xf]
    %v539 = vld [vmem:[#allocation5 + $0x6b8] sm:$0xf]
    %v540 = vld [vmem:[#allocation5 + $0x6bc] sm:$0xf]
    %v541 = vld [vmem:[#allocation5 + $0x6c0] sm:$0xf]
    %v542 = vld [vmem:[#allocation5 + $0x6c4] sm:$0xf]
    %v543 = vld [vmem:[#allocation5 + $0x6c8] sm:$0xf]
    %v544 = vld [vmem:[#allocation5 + $0x6cc] sm:$0xf]
    %v545 = vld [vmem:[#allocation5 + $0x6d0] sm:$0xf]
    %v546 = vld [vmem:[#allocation5 + $0x6d4] sm:$0xf]
    %v547 = vld [vmem:[#allocation5 + $0x6d8] sm:$0xf]
    %v548 = vld [vmem:[#allocation5 + $0x6dc] sm:$0xf]
    %v549 = vld [vmem:[#allocation5 + $0x6e0] sm:$0xf]
    %v550 = vld [vmem:[#allocation5 + $0x6e4] sm:$0xf]
    %v551 = vld [vmem:[#allocation5 + $0x6e8] sm:$0xf]
    %v552 = vld [vmem:[#allocation5 + $0x6ec] sm:$0xf]
    %v553 = vld [vmem:[#allocation5 + $0x6f0] sm:$0xf]
    %v554 = vld [vmem:[#allocation5 + $0x6f4] sm:$0xf]
    %v555 = vld [vmem:[#allocation5 + $0x6f8] sm:$0xf]
    %v556 = vld [vmem:[#allocation5 + $0x6fc] sm:$0xf]
    %v557 = vld [vmem:[#allocation5 + $0x700] sm:$0xf]
    %v558 = vld [vmem:[#allocation5 + $0x704] sm:$0xf]
    %v559 = vld [vmem:[#allocation5 + $0x708] sm:$0xf]
    %v560 = vld [vmem:[#allocation5 + $0x70c] sm:$0xf]
    %v561 = vld [vmem:[#allocation5 + $0x710] sm:$0xf]
    %v562 = vld [vmem:[#allocation5 + $0x714] sm:$0xf]
    %v563 = vld [vmem:[#allocation5 + $0x718] sm:$0xf]
    %v564 = vld [vmem:[#allocation5 + $0x71c] sm:$0xf]
    %v565 = vld [vmem:[#allocation5 + $0x720] sm:$0xf]
    %v566 = vld [vmem:[#allocation5 + $0x724] sm:$0xf]
    %v567 = vld [vmem:[#allocation5 + $0x728] sm:$0xf]
    %v568 = vld [vmem:[#allocation5 + $0x72c] sm:$0xf]
    %v569 = vld [vmem:[#allocation5 + $0x730] sm:$0xf]
    %v570 = vld [vmem:[#allocation5 + $0x734] sm:$0xf]
    %v571 = vld [vmem:[#allocation5 + $0x738] sm:$0xf]
    %v572 = vld [vmem:[#allocation5 + $0x73c] sm:$0xf]
    %v573 = vld [vmem:[#allocation5 + $0x740] sm:$0xf]
    %v574 = vld [vmem:[#allocation5 + $0x744] sm:$0xf]
    %v575 = vld [vmem:[#allocation5 + $0x748] sm:$0xf]
    %v576 = vld [vmem:[#allocation5 + $0x74c] sm:$0xf]
    %v577 = vld [vmem:[#allocation5 + $0x750] sm:$0xf]
    %v578 = vld [vmem:[#allocation5 + $0x754] sm:$0xf]
    %v579 = vld [vmem:[#allocation5 + $0x758] sm:$0xf]
    %v580 = vld [vmem:[#allocation5 + $0x75c] sm:$0xf]
    %v581 = vld [vmem:[#allocation5 + $0x760] sm:$0xf]
    %v582 = vld [vmem:[#allocation5 + $0x764] sm:$0xf]
    %v583 = vld [vmem:[#allocation5 + $0x768] sm:$0xf]
    %v584 = vld [vmem:[#allocation5 + $0x76c] sm:$0xf]
    %v585 = vld [vmem:[#allocation5 + $0x770] sm:$0xf]
    %v586 = vld [vmem:[#allocation5 + $0x774] sm:$0xf]
    %v587 = vld [vmem:[#allocation5 + $0x778] sm:$0xf]
    %v588 = vld [vmem:[#allocation5 + $0x77c] sm:$0xf]
    %v589 = vld [vmem:[#allocation5 + $0x780] sm:$0xf]
    %v590 = vld [vmem:[#allocation5 + $0x784] sm:$0xf]
    %v591 = vld [vmem:[#allocation5 + $0x788] sm:$0xf]
    %v592 = vld [vmem:[#allocation5 + $0x78c] sm:$0xf]
    %v593 = vld [vmem:[#allocation5 + $0x790] sm:$0xf]
    %v594 = vld [vmem:[#allocation5 + $0x794] sm:$0xf]
    %v595 = vld [vmem:[#allocation5 + $0x798] sm:$0xf]
    %v596 = vld [vmem:[#allocation5 + $0x79c] sm:$0xf]
    %v597 = vld [vmem:[#allocation5 + $0x7a0] sm:$0xf]
    %v598 = vld [vmem:[#allocation5 + $0x7a4] sm:$0xf]
    %v599 = vld [vmem:[#allocation5 + $0x7a8] sm:$0xf]
    %v600 = vld [vmem:[#allocation5 + $0x7ac] sm:$0xf]
    %v601 = vld [vmem:[#allocation5 + $0x7b0] sm:$0xf]
    %v602 = vld [vmem:[#allocation5 + $0x7b4] sm:$0xf]
    %v603 = vld [vmem:[#allocation5 + $0x7b8] sm:$0xf]
    %v604 = vld [vmem:[#allocation5 + $0x7bc] sm:$0xf]
    %v605 = vld [vmem:[#allocation5 + $0x7c0] sm:$0xf]
    %v606 = vld [vmem:[#allocation5 + $0x7c4] sm:$0xf]
    %v607 = vld [vmem:[#allocation5 + $0x7c8] sm:$0xf]
    %v608 = vld [vmem:[#allocation5 + $0x7cc] sm:$0xf]
    %v609 = vld [vmem:[#allocation5 + $0x7d0] sm:$0xf]
    %v610 = vld [vmem:[#allocation5 + $0x7d4] sm:$0xf]
    %v611 = vld [vmem:[#allocation5 + $0x7d8] sm:$0xf]
    %v612 = vld [vmem:[#allocation5 + $0x7dc] sm:$0xf]
    %v613 = vld [vmem:[#allocation5 + $0x7e0] sm:$0xf]
    %v614 = vld [vmem:[#allocation5 + $0x7e4] sm:$0xf]
    %v615 = vld [vmem:[#allocation5 + $0x7e8] sm:$0xf]
    %v616 = vld [vmem:[#allocation5 + $0x7ec] sm:$0xf]
    %v617 = vld [vmem:[#allocation5 + $0x7f0] sm:$0xf]
    %v618 = vld [vmem:[#allocation5 + $0x7f4] sm:$0xf]
    %v619 = vld [vmem:[#allocation5 + $0x7f8] sm:$0xf]
    %v620 = vld [vmem:[#allocation5 + $0x7fc] sm:$0xf]
    %v621 = vld [vmem:[%s2] sm:$0x1]
    %v623 = vperm.slane %v621, 0
    %v1137 = vunpack.c.l.b16 %v109
    %v1138 = vunpack.c.l.b16 %v110
    %v1139 = vunpack.c.l.b16 %v111
    %v1140 = vunpack.c.l.b16 %v112
    %v1141 = vunpack.c.l.b16 %v113
    %v1142 = vunpack.c.l.b16 %v114
    %v1143 = vunpack.c.l.b16 %v115
    %v1144 = vunpack.c.l.b16 %v116
    %v1145 = vunpack.c.l.b16 %v117
    %v1146 = vunpack.c.l.b16 %v118
    %v1147 = vunpack.c.l.b16 %v119
    %v1148 = vunpack.c.l.b16 %v120
    %v1149 = vunpack.c.l.b16 %v121
    %v1150 = vunpack.c.l.b16 %v122
    %v1151 = vunpack.c.l.b16 %v123
    %v1152 = vunpack.c.l.b16 %v124
    %v1153 = vunpack.c.l.b16 %v125
    %v1154 = vunpack.c.l.b16 %v126
    %v1155 = vunpack.c.l.b16 %v127
    %v1156 = vunpack.c.l.b16 %v128
    %v1157 = vunpack.c.l.b16 %v129
    %v1158 = vunpack.c.l.b16 %v130
    %v1159 = vunpack.c.l.b16 %v131
    %v1160 = vunpack.c.l.b16 %v132
    %v1161 = vunpack.c.l.b16 %v133
    %v1162 = vunpack.c.l.b16 %v134
    %v1163 = vunpack.c.l.b16 %v135
    %v1164 = vunpack.c.l.b16 %v136
    %v1165 = vunpack.c.l.b16 %v137
    %v1166 = vunpack.c.l.b16 %v138
    %v1167 = vunpack.c.l.b16 %v139
    %v1168 = vunpack.c.l.b16 %v140
    %v1169 = vunpack.c.l.b16 %v141
    %v1170 = vunpack.c.l.b16 %v142
    %v1171 = vunpack.c.l.b16 %v143
    %v1172 = vunpack.c.l.b16 %v144
    %v1173 = vunpack.c.l.b16 %v145
    %v1174 = vunpack.c.l.b16 %v146
    %v1175 = vunpack.c.l.b16 %v147
    %v1176 = vunpack.c.l.b16 %v148
    %v1177 = vunpack.c.l.b16 %v149
    %v1178 = vunpack.c.l.b16 %v150
    %v1179 = vunpack.c.l.b16 %v151
    %v1180 = vunpack.c.l.b16 %v152
    %v1181 = vunpack.c.l.b16 %v153
    %v1182 = vunpack.c.l.b16 %v154
    %v1183 = vunpack.c.l.b16 %v155
    %v1184 = vunpack.c.l.b16 %v156
    %v1185 = vunpack.c.l.b16 %v157
    %v1186 = vunpack.c.l.b16 %v158
    %v1187 = vunpack.c.l.b16 %v159
    %v1188 = vunpack.c.l.b16 %v160
    %v1189 = vunpack.c.l.b16 %v161
    %v1190 = vunpack.c.l.b16 %v162
    %v1191 = vunpack.c.l.b16 %v163
    %v1192 = vunpack.c.l.b16 %v164
    %v1193 = vunpack.c.l.b16 %v165
    %v1194 = vunpack.c.l.b16 %v166
    %v1195 = vunpack.c.l.b16 %v167
    %v1196 = vunpack.c.l.b16 %v168
    %v1197 = vunpack.c.l.b16 %v169
    %v1198 = vunpack.c.l.b16 %v170
    %v1199 = vunpack.c.l.b16 %v171
    %v1200 = vunpack.c.l.b16 %v172
    %v1201 = vunpack.c.l.b16 %v173
    %v1202 = vunpack.c.l.b16 %v174
    %v1203 = vunpack.c.l.b16 %v175
    %v1204 = vunpack.c.l.b16 %v176
    %v1205 = vunpack.c.l.b16 %v177
    %v1206 = vunpack.c.l.b16 %v178
    %v1207 = vunpack.c.l.b16 %v179
    %v1208 = vunpack.c.l.b16 %v180
    %v1209 = vunpack.c.l.b16 %v181
    %v1210 = vunpack.c.l.b16 %v182
    %v1211 = vunpack.c.l.b16 %v183
    %v1212 = vunpack.c.l.b16 %v184
    %v1213 = vunpack.c.l.b16 %v185
    %v1214 = vunpack.c.l.b16 %v186
    %v1215 = vunpack.c.l.b16 %v187
    %v1216 = vunpack.c.l.b16 %v188
    %v1217 = vunpack.c.l.b16 %v189
    %v1218 = vunpack.c.l.b16 %v190
    %v1219 = vunpack.c.l.b16 %v191
    %v1220 = vunpack.c.l.b16 %v192
    %v1221 = vunpack.c.l.b16 %v193
    %v1222 = vunpack.c.l.b16 %v194
    %v1223 = vunpack.c.l.b16 %v195
    %v1224 = vunpack.c.l.b16 %v196
    %v1225 = vunpack.c.l.b16 %v197
    %v1226 = vunpack.c.l.b16 %v198
    %v1227 = vunpack.c.l.b16 %v199
    %v1228 = vunpack.c.l.b16 %v200
    %v1229 = vunpack.c.l.b16 %v201
    %v1230 = vunpack.c.l.b16 %v202
    %v1231 = vunpack.c.l.b16 %v203
    %v1232 = vunpack.c.l.b16 %v204
    %v1233 = vunpack.c.l.b16 %v205
    %v1234 = vunpack.c.l.b16 %v206
    %v1235 = vunpack.c.l.b16 %v207
    %v1236 = vunpack.c.l.b16 %v208
    %v1237 = vunpack.c.l.b16 %v209
    %v1238 = vunpack.c.l.b16 %v210
    %v1239 = vunpack.c.l.b16 %v211
    %v1240 = vunpack.c.l.b16 %v212
    %v1241 = vunpack.c.l.b16 %v213
    %v1242 = vunpack.c.l.b16 %v214
    %v1243 = vunpack.c.l.b16 %v215
    %v1244 = vunpack.c.l.b16 %v216
    %v1245 = vunpack.c.l.b16 %v217
    %v1246 = vunpack.c.l.b16 %v218
    %v1247 = vunpack.c.l.b16 %v219
    %v1248 = vunpack.c.l.b16 %v220
    %v1249 = vunpack.c.l.b16 %v221
    %v1250 = vunpack.c.l.b16 %v222
    %v1251 = vunpack.c.l.b16 %v223
    %v1252 = vunpack.c.l.b16 %v224
    %v1253 = vunpack.c.l.b16 %v225
    %v1254 = vunpack.c.l.b16 %v226
    %v1255 = vunpack.c.l.b16 %v227
    %v1256 = vunpack.c.l.b16 %v228
    %v1257 = vunpack.c.l.b16 %v229
    %v1258 = vunpack.c.l.b16 %v230
    %v1259 = vunpack.c.l.b16 %v231
    %v1260 = vunpack.c.l.b16 %v232
    %v1261 = vunpack.c.l.b16 %v233
    %v1262 = vunpack.c.l.b16 %v234
    %v1263 = vunpack.c.l.b16 %v235
    %v1264 = vunpack.c.l.b16 %v236
    %v1265 = vunpack.c.l.b16 %v237
    %v1266 = vunpack.c.l.b16 %v238
    %v1267 = vunpack.c.l.b16 %v239
    %v1268 = vunpack.c.l.b16 %v240
    %v1269 = vunpack.c.l.b16 %v241
    %v1270 = vunpack.c.l.b16 %v242
    %v1271 = vunpack.c.l.b16 %v243
    %v1272 = vunpack.c.l.b16 %v244
    %v1273 = vunpack.c.l.b16 %v245
    %v1274 = vunpack.c.l.b16 %v246
    %v1275 = vunpack.c.l.b16 %v247
    %v1276 = vunpack.c.l.b16 %v248
    %v1277 = vunpack.c.l.b16 %v249
    %v1278 = vunpack.c.l.b16 %v250
    %v1279 = vunpack.c.l.b16 %v251
    %v1280 = vunpack.c.l.b16 %v252
    %v1281 = vunpack.c.l.b16 %v253
    %v1282 = vunpack.c.l.b16 %v254
    %v1283 = vunpack.c.l.b16 %v255
    %v1284 = vunpack.c.l.b16 %v256
    %v1285 = vunpack.c.l.b16 %v257
    %v1286 = vunpack.c.l.b16 %v258
    %v1287 = vunpack.c.l.b16 %v259
    %v1288 = vunpack.c.l.b16 %v260
    %v1289 = vunpack.c.l.b16 %v261
    %v1290 = vunpack.c.l.b16 %v262
    %v1291 = vunpack.c.l.b16 %v263
    %v1292 = vunpack.c.l.b16 %v264
    %v1293 = vunpack.c.l.b16 %v265
    %v1294 = vunpack.c.l.b16 %v266
    %v1295 = vunpack.c.l.b16 %v267
    %v1296 = vunpack.c.l.b16 %v268
    %v1297 = vunpack.c.l.b16 %v269
    %v1298 = vunpack.c.l.b16 %v270
    %v1299 = vunpack.c.l.b16 %v271
    %v1300 = vunpack.c.l.b16 %v272
    %v1301 = vunpack.c.l.b16 %v273
    %v1302 = vunpack.c.l.b16 %v274
    %v1303 = vunpack.c.l.b16 %v275
    %v1304 = vunpack.c.l.b16 %v276
    %v1305 = vunpack.c.l.b16 %v277
    %v1306 = vunpack.c.l.b16 %v278
    %v1307 = vunpack.c.l.b16 %v279
    %v1308 = vunpack.c.l.b16 %v280
    %v1309 = vunpack.c.l.b16 %v281
    %v1310 = vunpack.c.l.b16 %v282
    %v1311 = vunpack.c.l.b16 %v283
    %v1312 = vunpack.c.l.b16 %v284
    %v1313 = vunpack.c.l.b16 %v285
    %v1314 = vunpack.c.l.b16 %v286
    %v1315 = vunpack.c.l.b16 %v287
    %v1316 = vunpack.c.l.b16 %v288
    %v1317 = vunpack.c.l.b16 %v289
    %v1318 = vunpack.c.l.b16 %v290
    %v1319 = vunpack.c.l.b16 %v291
    %v1320 = vunpack.c.l.b16 %v292
    %v1321 = vunpack.c.l.b16 %v293
    %v1322 = vunpack.c.l.b16 %v294
    %v1323 = vunpack.c.l.b16 %v295
    %v1324 = vunpack.c.l.b16 %v296
    %v1325 = vunpack.c.l.b16 %v297
    %v1326 = vunpack.c.l.b16 %v298
    %v1327 = vunpack.c.l.b16 %v299
    %v1328 = vunpack.c.l.b16 %v300
    %v1329 = vunpack.c.l.b16 %v301
    %v1330 = vunpack.c.l.b16 %v302
    %v1331 = vunpack.c.l.b16 %v303
    %v1332 = vunpack.c.l.b16 %v304
    %v1333 = vunpack.c.l.b16 %v305
    %v1334 = vunpack.c.l.b16 %v306
    %v1335 = vunpack.c.l.b16 %v307
    %v1336 = vunpack.c.l.b16 %v308
    %v1337 = vunpack.c.l.b16 %v309
    %v1338 = vunpack.c.l.b16 %v310
    %v1339 = vunpack.c.l.b16 %v311
    %v1340 = vunpack.c.l.b16 %v312
    %v1341 = vunpack.c.l.b16 %v313
    %v1342 = vunpack.c.l.b16 %v314
    %v1343 = vunpack.c.l.b16 %v315
    %v1344 = vunpack.c.l.b16 %v316
    %v1345 = vunpack.c.l.b16 %v317
    %v1346 = vunpack.c.l.b16 %v318
    %v1347 = vunpack.c.l.b16 %v319
    %v1348 = vunpack.c.l.b16 %v320
    %v1349 = vunpack.c.l.b16 %v321
    %v1350 = vunpack.c.l.b16 %v322
    %v1351 = vunpack.c.l.b16 %v323
    %v1352 = vunpack.c.l.b16 %v324
    %v1353 = vunpack.c.l.b16 %v325
    %v1354 = vunpack.c.l.b16 %v326
    %v1355 = vunpack.c.l.b16 %v327
    %v1356 = vunpack.c.l.b16 %v328
    %v1357 = vunpack.c.l.b16 %v329
    %v1358 = vunpack.c.l.b16 %v330
    %v1359 = vunpack.c.l.b16 %v331
    %v1360 = vunpack.c.l.b16 %v332
    %v1361 = vunpack.c.l.b16 %v333
    %v1362 = vunpack.c.l.b16 %v334
    %v1363 = vunpack.c.l.b16 %v335
    %v1364 = vunpack.c.l.b16 %v336
    %v1365 = vunpack.c.l.b16 %v337
    %v1366 = vunpack.c.l.b16 %v338
    %v1367 = vunpack.c.l.b16 %v339
    %v1368 = vunpack.c.l.b16 %v340
    %v1369 = vunpack.c.l.b16 %v341
    %v1370 = vunpack.c.l.b16 %v342
    %v1371 = vunpack.c.l.b16 %v343
    %v1372 = vunpack.c.l.b16 %v344
    %v1373 = vunpack.c.l.b16 %v345
    %v1374 = vunpack.c.l.b16 %v346
    %v1375 = vunpack.c.l.b16 %v347
    %v1376 = vunpack.c.l.b16 %v348
    %v1377 = vunpack.c.l.b16 %v349
    %v1378 = vunpack.c.l.b16 %v350
    %v1379 = vunpack.c.l.b16 %v351
    %v1380 = vunpack.c.l.b16 %v352
    %v1381 = vunpack.c.l.b16 %v353
    %v1382 = vunpack.c.l.b16 %v354
    %v1383 = vunpack.c.l.b16 %v355
    %v1384 = vunpack.c.l.b16 %v356
    %v1385 = vunpack.c.l.b16 %v357
    %v1386 = vunpack.c.l.b16 %v358
    %v1387 = vunpack.c.l.b16 %v359
    %v1388 = vunpack.c.l.b16 %v360
    %v1389 = vunpack.c.l.b16 %v361
    %v1390 = vunpack.c.l.b16 %v362
    %v1391 = vunpack.c.l.b16 %v363
    %v1392 = vunpack.c.l.b16 %v364
    %v1393 = vunpack.c.l.b16 %v365
    %v1394 = vunpack.c.l.b16 %v366
    %v1395 = vunpack.c.l.b16 %v367
    %v1396 = vunpack.c.l.b16 %v368
    %v1397 = vunpack.c.l.b16 %v369
    %v1398 = vunpack.c.l.b16 %v370
    %v1399 = vunpack.c.l.b16 %v371
    %v1400 = vunpack.c.l.b16 %v372
    %v1401 = vunpack.c.l.b16 %v373
    %v1402 = vunpack.c.l.b16 %v374
    %v1403 = vunpack.c.l.b16 %v375
    %v1404 = vunpack.c.l.b16 %v376
    %v1405 = vunpack.c.l.b16 %v377
    %v1406 = vunpack.c.l.b16 %v378
    %v1407 = vunpack.c.l.b16 %v379
    %v1408 = vunpack.c.l.b16 %v380
    %v1409 = vunpack.c.l.b16 %v381
    %v1410 = vunpack.c.l.b16 %v382
    %v1411 = vunpack.c.l.b16 %v383
    %v1412 = vunpack.c.l.b16 %v384
    %v1413 = vunpack.c.l.b16 %v385
    %v1414 = vunpack.c.l.b16 %v386
    %v1415 = vunpack.c.l.b16 %v387
    %v1416 = vunpack.c.l.b16 %v388
    %v1417 = vunpack.c.l.b16 %v389
    %v1418 = vunpack.c.l.b16 %v390
    %v1419 = vunpack.c.l.b16 %v391
    %v1420 = vunpack.c.l.b16 %v392
    %v1421 = vunpack.c.l.b16 %v393
    %v1422 = vunpack.c.l.b16 %v394
    %v1423 = vunpack.c.l.b16 %v395
    %v1424 = vunpack.c.l.b16 %v396
    %v1425 = vunpack.c.l.b16 %v397
    %v1426 = vunpack.c.l.b16 %v398
    %v1427 = vunpack.c.l.b16 %v399
    %v1428 = vunpack.c.l.b16 %v400
    %v1429 = vunpack.c.l.b16 %v401
    %v1430 = vunpack.c.l.b16 %v402
    %v1431 = vunpack.c.l.b16 %v403
    %v1432 = vunpack.c.l.b16 %v404
    %v1433 = vunpack.c.l.b16 %v405
    %v1434 = vunpack.c.l.b16 %v406
    %v1435 = vunpack.c.l.b16 %v407
    %v1436 = vunpack.c.l.b16 %v408
    %v1437 = vunpack.c.l.b16 %v409
    %v1438 = vunpack.c.l.b16 %v410
    %v1439 = vunpack.c.l.b16 %v411
    %v1440 = vunpack.c.l.b16 %v412
    %v1441 = vunpack.c.l.b16 %v413
    %v1442 = vunpack.c.l.b16 %v414
    %v1443 = vunpack.c.l.b16 %v415
    %v1444 = vunpack.c.l.b16 %v416
    %v1445 = vunpack.c.l.b16 %v417
    %v1446 = vunpack.c.l.b16 %v418
    %v1447 = vunpack.c.l.b16 %v419
    %v1448 = vunpack.c.l.b16 %v420
    %v1449 = vunpack.c.l.b16 %v421
    %v1450 = vunpack.c.l.b16 %v422
    %v1451 = vunpack.c.l.b16 %v423
    %v1452 = vunpack.c.l.b16 %v424
    %v1453 = vunpack.c.l.b16 %v425
    %v1454 = vunpack.c.l.b16 %v426
    %v1455 = vunpack.c.l.b16 %v427
    %v1456 = vunpack.c.l.b16 %v428
    %v1457 = vunpack.c.l.b16 %v429
    %v1458 = vunpack.c.l.b16 %v430
    %v1459 = vunpack.c.l.b16 %v431
    %v1460 = vunpack.c.l.b16 %v432
    %v1461 = vunpack.c.l.b16 %v433
    %v1462 = vunpack.c.l.b16 %v434
    %v1463 = vunpack.c.l.b16 %v435
    %v1464 = vunpack.c.l.b16 %v436
    %v1465 = vunpack.c.l.b16 %v437
    %v1466 = vunpack.c.l.b16 %v438
    %v1467 = vunpack.c.l.b16 %v439
    %v1468 = vunpack.c.l.b16 %v440
    %v1469 = vunpack.c.l.b16 %v441
    %v1470 = vunpack.c.l.b16 %v442
    %v1471 = vunpack.c.l.b16 %v443
    %v1472 = vunpack.c.l.b16 %v444
    %v1473 = vunpack.c.l.b16 %v445
    %v1474 = vunpack.c.l.b16 %v446
    %v1475 = vunpack.c.l.b16 %v447
    %v1476 = vunpack.c.l.b16 %v448
    %v1477 = vunpack.c.l.b16 %v449
    %v1478 = vunpack.c.l.b16 %v450
    %v1479 = vunpack.c.l.b16 %v451
    %v1480 = vunpack.c.l.b16 %v452
    %v1481 = vunpack.c.l.b16 %v453
    %v1482 = vunpack.c.l.b16 %v454
    %v1483 = vunpack.c.l.b16 %v455
    %v1484 = vunpack.c.l.b16 %v456
    %v1485 = vunpack.c.l.b16 %v457
    %v1486 = vunpack.c.l.b16 %v458
    %v1487 = vunpack.c.l.b16 %v459
    %v1488 = vunpack.c.l.b16 %v460
    %v1489 = vunpack.c.l.b16 %v461
    %v1490 = vunpack.c.l.b16 %v462
    %v1491 = vunpack.c.l.b16 %v463
    %v1492 = vunpack.c.l.b16 %v464
    %v1493 = vunpack.c.l.b16 %v465
    %v1494 = vunpack.c.l.b16 %v466
    %v1495 = vunpack.c.l.b16 %v467
    %v1496 = vunpack.c.l.b16 %v468
    %v1497 = vunpack.c.l.b16 %v469
    %v1498 = vunpack.c.l.b16 %v470
    %v1499 = vunpack.c.l.b16 %v471
    %v1500 = vunpack.c.l.b16 %v472
    %v1501 = vunpack.c.l.b16 %v473
    %v1502 = vunpack.c.l.b16 %v474
    %v1503 = vunpack.c.l.b16 %v475
    %v1504 = vunpack.c.l.b16 %v476
    %v1505 = vunpack.c.l.b16 %v477
    %v1506 = vunpack.c.l.b16 %v478
    %v1507 = vunpack.c.l.b16 %v479
    %v1508 = vunpack.c.l.b16 %v480
    %v1509 = vunpack.c.l.b16 %v481
    %v1510 = vunpack.c.l.b16 %v482
    %v1511 = vunpack.c.l.b16 %v483
    %v1512 = vunpack.c.l.b16 %v484
    %v1513 = vunpack.c.l.b16 %v485
    %v1514 = vunpack.c.l.b16 %v486
    %v1515 = vunpack.c.l.b16 %v487
    %v1516 = vunpack.c.l.b16 %v488
    %v1517 = vunpack.c.l.b16 %v489
    %v1518 = vunpack.c.l.b16 %v490
    %v1519 = vunpack.c.l.b16 %v491
    %v1520 = vunpack.c.l.b16 %v492
    %v1521 = vunpack.c.l.b16 %v493
    %v1522 = vunpack.c.l.b16 %v494
    %v1523 = vunpack.c.l.b16 %v495
    %v1524 = vunpack.c.l.b16 %v496
    %v1525 = vunpack.c.l.b16 %v497
    %v1526 = vunpack.c.l.b16 %v498
    %v1527 = vunpack.c.l.b16 %v499
    %v1528 = vunpack.c.l.b16 %v500
    %v1529 = vunpack.c.l.b16 %v501
    %v1530 = vunpack.c.l.b16 %v502
    %v1531 = vunpack.c.l.b16 %v503
    %v1532 = vunpack.c.l.b16 %v504
    %v1533 = vunpack.c.l.b16 %v505
    %v1534 = vunpack.c.l.b16 %v506
    %v1535 = vunpack.c.l.b16 %v507
    %v1536 = vunpack.c.l.b16 %v508
    %v1537 = vunpack.c.l.b16 %v509
    %v1538 = vunpack.c.l.b16 %v510
    %v1539 = vunpack.c.l.b16 %v511
    %v1540 = vunpack.c.l.b16 %v512
    %v1541 = vunpack.c.l.b16 %v513
    %v1542 = vunpack.c.l.b16 %v514
    %v1543 = vunpack.c.l.b16 %v515
    %v1544 = vunpack.c.l.b16 %v516
    %v1545 = vunpack.c.l.b16 %v517
    %v1546 = vunpack.c.l.b16 %v518
    %v1547 = vunpack.c.l.b16 %v519
    %v1548 = vunpack.c.l.b16 %v520
    %v1549 = vunpack.c.l.b16 %v521
    %v1550 = vunpack.c.l.b16 %v522
    %v1551 = vunpack.c.l.b16 %v523
    %v1552 = vunpack.c.l.b16 %v524
    %v1553 = vunpack.c.l.b16 %v525
    %v1554 = vunpack.c.l.b16 %v526
    %v1555 = vunpack.c.l.b16 %v527
    %v1556 = vunpack.c.l.b16 %v528
    %v1557 = vunpack.c.l.b16 %v529
    %v1558 = vunpack.c.l.b16 %v530
    %v1559 = vunpack.c.l.b16 %v531
    %v1560 = vunpack.c.l.b16 %v532
    %v1561 = vunpack.c.l.b16 %v533
    %v1562 = vunpack.c.l.b16 %v534
    %v1563 = vunpack.c.l.b16 %v535
    %v1564 = vunpack.c.l.b16 %v536
    %v1565 = vunpack.c.l.b16 %v537
    %v1566 = vunpack.c.l.b16 %v538
    %v1567 = vunpack.c.l.b16 %v539
    %v1568 = vunpack.c.l.b16 %v540
    %v1569 = vunpack.c.l.b16 %v541
    %v1570 = vunpack.c.l.b16 %v542
    %v1571 = vunpack.c.l.b16 %v543
    %v1572 = vunpack.c.l.b16 %v544
    %v1573 = vunpack.c.l.b16 %v545
    %v1574 = vunpack.c.l.b16 %v546
    %v1575 = vunpack.c.l.b16 %v547
    %v1576 = vunpack.c.l.b16 %v548
    %v1577 = vunpack.c.l.b16 %v549
    %v1578 = vunpack.c.l.b16 %v550
    %v1579 = vunpack.c.l.b16 %v551
    %v1580 = vunpack.c.l.b16 %v552
    %v1581 = vunpack.c.l.b16 %v553
    %v1582 = vunpack.c.l.b16 %v554
    %v1583 = vunpack.c.l.b16 %v555
    %v1584 = vunpack.c.l.b16 %v556
    %v1585 = vunpack.c.l.b16 %v557
    %v1586 = vunpack.c.l.b16 %v558
    %v1587 = vunpack.c.l.b16 %v559
    %v1588 = vunpack.c.l.b16 %v560
    %v1589 = vunpack.c.l.b16 %v561
    %v1590 = vunpack.c.l.b16 %v562
    %v1591 = vunpack.c.l.b16 %v563
    %v1592 = vunpack.c.l.b16 %v564
    %v1593 = vunpack.c.l.b16 %v565
    %v1594 = vunpack.c.l.b16 %v566
    %v1595 = vunpack.c.l.b16 %v567
    %v1596 = vunpack.c.l.b16 %v568
    %v1597 = vunpack.c.l.b16 %v569
    %v1598 = vunpack.c.l.b16 %v570
    %v1599 = vunpack.c.l.b16 %v571
    %v1600 = vunpack.c.l.b16 %v572
    %v1601 = vunpack.c.l.b16 %v573
    %v1602 = vunpack.c.l.b16 %v574
    %v1603 = vunpack.c.l.b16 %v575
    %v1604 = vunpack.c.l.b16 %v576
    %v1605 = vunpack.c.l.b16 %v577
    %v1606 = vunpack.c.l.b16 %v578
    %v1607 = vunpack.c.l.b16 %v579
    %v1608 = vunpack.c.l.b16 %v580
    %v1609 = vunpack.c.l.b16 %v581
    %v1610 = vunpack.c.l.b16 %v582
    %v1611 = vunpack.c.l.b16 %v583
    %v1612 = vunpack.c.l.b16 %v584
    %v1613 = vunpack.c.l.b16 %v585
    %v1614 = vunpack.c.l.b16 %v586
    %v1615 = vunpack.c.l.b16 %v587
    %v1616 = vunpack.c.l.b16 %v588
    %v1617 = vunpack.c.l.b16 %v589
    %v1618 = vunpack.c.l.b16 %v590
    %v1619 = vunpack.c.l.b16 %v591
    %v1620 = vunpack.c.l.b16 %v592
    %v1621 = vunpack.c.l.b16 %v593
    %v1622 = vunpack.c.l.b16 %v594
    %v1623 = vunpack.c.l.b16 %v595
    %v1624 = vunpack.c.l.b16 %v596
    %v1625 = vunpack.c.l.b16 %v597
    %v1626 = vunpack.c.l.b16 %v598
    %v1627 = vunpack.c.l.b16 %v599
    %v1628 = vunpack.c.l.b16 %v600
    %v1629 = vunpack.c.l.b16 %v601
    %v1630 = vunpack.c.l.b16 %v602
    %v1631 = vunpack.c.l.b16 %v603
    %v1632 = vunpack.c.l.b16 %v604
    %v1633 = vunpack.c.l.b16 %v605
    %v1634 = vunpack.c.l.b16 %v606
    %v1635 = vunpack.c.l.b16 %v607
    %v1636 = vunpack.c.l.b16 %v608
    %v1637 = vunpack.c.l.b16 %v609
    %v1638 = vunpack.c.l.b16 %v610
    %v1639 = vunpack.c.l.b16 %v611
    %v1640 = vunpack.c.l.b16 %v612
    %v1641 = vunpack.c.l.b16 %v613
    %v1642 = vunpack.c.l.b16 %v614
    %v1643 = vunpack.c.l.b16 %v615
    %v1644 = vunpack.c.l.b16 %v616
    %v1645 = vunpack.c.l.b16 %v617
    %v1646 = vunpack.c.l.b16 %v618
    %v1647 = vunpack.c.l.b16 %v619
    %v1648 = vunpack.c.l.b16 %v620
    %v1649 = vpack.c.b16 %v1138, %v1137
    %v1650 = vpack.c.b16 %v1140, %v1139
    %v1651 = vpack.c.b16 %v1142, %v1141
    %v1652 = vpack.c.b16 %v1144, %v1143
    %v1653 = vpack.c.b16 %v1146, %v1145
    %v1654 = vpack.c.b16 %v1148, %v1147
    %v1655 = vpack.c.b16 %v1150, %v1149
    %v1656 = vpack.c.b16 %v1152, %v1151
    %v1657 = vpack.c.b16 %v1154, %v1153
    %v1658 = vpack.c.b16 %v1156, %v1155
    %v1659 = vpack.c.b16 %v1158, %v1157
    %v1660 = vpack.c.b16 %v1160, %v1159
    %v1661 = vpack.c.b16 %v1162, %v1161
    %v1662 = vpack.c.b16 %v1164, %v1163
    %v1663 = vpack.c.b16 %v1166, %v1165
    %v1664 = vpack.c.b16 %v1168, %v1167
    %v1665 = vpack.c.b16 %v1170, %v1169
    %v1666 = vpack.c.b16 %v1172, %v1171
    %v1667 = vpack.c.b16 %v1174, %v1173
    %v1668 = vpack.c.b16 %v1176, %v1175
    %v1669 = vpack.c.b16 %v1178, %v1177
    %v1670 = vpack.c.b16 %v1180, %v1179
    %v1671 = vpack.c.b16 %v1182, %v1181
    %v1672 = vpack.c.b16 %v1184, %v1183
    %v1673 = vpack.c.b16 %v1186, %v1185
    %v1674 = vpack.c.b16 %v1188, %v1187
    %v1675 = vpack.c.b16 %v1190, %v1189
    %v1676 = vpack.c.b16 %v1192, %v1191
    %v1677 = vpack.c.b16 %v1194, %v1193
    %v1678 = vpack.c.b16 %v1196, %v1195
    %v1679 = vpack.c.b16 %v1198, %v1197
    %v1680 = vpack.c.b16 %v1200, %v1199
    %v1681 = vpack.c.b16 %v1202, %v1201
    %v1682 = vpack.c.b16 %v1204, %v1203
    %v1683 = vpack.c.b16 %v1206, %v1205
    %v1684 = vpack.c.b16 %v1208, %v1207
    %v1685 = vpack.c.b16 %v1210, %v1209
    %v1686 = vpack.c.b16 %v1212, %v1211
    %v1687 = vpack.c.b16 %v1214, %v1213
    %v1688 = vpack.c.b16 %v1216, %v1215
    %v1689 = vpack.c.b16 %v1218, %v1217
    %v1690 = vpack.c.b16 %v1220, %v1219
    %v1691 = vpack.c.b16 %v1222, %v1221
    %v1692 = vpack.c.b16 %v1224, %v1223
    %v1693 = vpack.c.b16 %v1226, %v1225
    %v1694 = vpack.c.b16 %v1228, %v1227
    %v1695 = vpack.c.b16 %v1230, %v1229
    %v1696 = vpack.c.b16 %v1232, %v1231
    %v1697 = vpack.c.b16 %v1234, %v1233
    %v1698 = vpack.c.b16 %v1236, %v1235
    %v1699 = vpack.c.b16 %v1238, %v1237
    %v1700 = vpack.c.b16 %v1240, %v1239
    %v1701 = vpack.c.b16 %v1242, %v1241
    %v1702 = vpack.c.b16 %v1244, %v1243
    %v1703 = vpack.c.b16 %v1246, %v1245
    %v1704 = vpack.c.b16 %v1248, %v1247
    %v1705 = vpack.c.b16 %v1250, %v1249
    %v1706 = vpack.c.b16 %v1252, %v1251
    %v1707 = vpack.c.b16 %v1254, %v1253
    %v1708 = vpack.c.b16 %v1256, %v1255
    %v1709 = vpack.c.b16 %v1258, %v1257
    %v1710 = vpack.c.b16 %v1260, %v1259
    %v1711 = vpack.c.b16 %v1262, %v1261
    %v1712 = vpack.c.b16 %v1264, %v1263
    %v1713 = vpack.c.b16 %v1266, %v1265
    %v1714 = vpack.c.b16 %v1268, %v1267
    %v1715 = vpack.c.b16 %v1270, %v1269
    %v1716 = vpack.c.b16 %v1272, %v1271
    %v1717 = vpack.c.b16 %v1274, %v1273
    %v1718 = vpack.c.b16 %v1276, %v1275
    %v1719 = vpack.c.b16 %v1278, %v1277
    %v1720 = vpack.c.b16 %v1280, %v1279
    %v1721 = vpack.c.b16 %v1282, %v1281
    %v1722 = vpack.c.b16 %v1284, %v1283
    %v1723 = vpack.c.b16 %v1286, %v1285
    %v1724 = vpack.c.b16 %v1288, %v1287
    %v1725 = vpack.c.b16 %v1290, %v1289
    %v1726 = vpack.c.b16 %v1292, %v1291
    %v1727 = vpack.c.b16 %v1294, %v1293
    %v1728 = vpack.c.b16 %v1296, %v1295
    %v1729 = vpack.c.b16 %v1298, %v1297
    %v1730 = vpack.c.b16 %v1300, %v1299
    %v1731 = vpack.c.b16 %v1302, %v1301
    %v1732 = vpack.c.b16 %v1304, %v1303
    %v1733 = vpack.c.b16 %v1306, %v1305
    %v1734 = vpack.c.b16 %v1308, %v1307
    %v1735 = vpack.c.b16 %v1310, %v1309
    %v1736 = vpack.c.b16 %v1312, %v1311
    %v1737 = vpack.c.b16 %v1314, %v1313
    %v1738 = vpack.c.b16 %v1316, %v1315
    %v1739 = vpack.c.b16 %v1318, %v1317
    %v1740 = vpack.c.b16 %v1320, %v1319
    %v1741 = vpack.c.b16 %v1322, %v1321
    %v1742 = vpack.c.b16 %v1324, %v1323
    %v1743 = vpack.c.b16 %v1326, %v1325
    %v1744 = vpack.c.b16 %v1328, %v1327
    %v1745 = vpack.c.b16 %v1330, %v1329
    %v1746 = vpack.c.b16 %v1332, %v1331
    %v1747 = vpack.c.b16 %v1334, %v1333
    %v1748 = vpack.c.b16 %v1336, %v1335
    %v1749 = vpack.c.b16 %v1338, %v1337
    %v1750 = vpack.c.b16 %v1340, %v1339
    %v1751 = vpack.c.b16 %v1342, %v1341
    %v1752 = vpack.c.b16 %v1344, %v1343
    %v1753 = vpack.c.b16 %v1346, %v1345
    %v1754 = vpack.c.b16 %v1348, %v1347
    %v1755 = vpack.c.b16 %v1350, %v1349
    %v1756 = vpack.c.b16 %v1352, %v1351
    %v1757 = vpack.c.b16 %v1354, %v1353
    %v1758 = vpack.c.b16 %v1356, %v1355
    %v1759 = vpack.c.b16 %v1358, %v1357
    %v1760 = vpack.c.b16 %v1360, %v1359
    %v1761 = vpack.c.b16 %v1362, %v1361
    %v1762 = vpack.c.b16 %v1364, %v1363
    %v1763 = vpack.c.b16 %v1366, %v1365
    %v1764 = vpack.c.b16 %v1368, %v1367
    %v1765 = vpack.c.b16 %v1370, %v1369
    %v1766 = vpack.c.b16 %v1372, %v1371
    %v1767 = vpack.c.b16 %v1374, %v1373
    %v1768 = vpack.c.b16 %v1376, %v1375
    %v1769 = vpack.c.b16 %v1378, %v1377
    %v1770 = vpack.c.b16 %v1380, %v1379
    %v1771 = vpack.c.b16 %v1382, %v1381
    %v1772 = vpack.c.b16 %v1384, %v1383
    %v1773 = vpack.c.b16 %v1386, %v1385
    %v1774 = vpack.c.b16 %v1388, %v1387
    %v1775 = vpack.c.b16 %v1390, %v1389
    %v1776 = vpack.c.b16 %v1392, %v1391
    %v1777 = vpack.c.b16 %v1394, %v1393
    %v1778 = vpack.c.b16 %v1396, %v1395
    %v1779 = vpack.c.b16 %v1398, %v1397
    %v1780 = vpack.c.b16 %v1400, %v1399
    %v1781 = vpack.c.b16 %v1402, %v1401
    %v1782 = vpack.c.b16 %v1404, %v1403
    %v1783 = vpack.c.b16 %v1406, %v1405
    %v1784 = vpack.c.b16 %v1408, %v1407
    %v1785 = vpack.c.b16 %v1410, %v1409
    %v1786 = vpack.c.b16 %v1412, %v1411
    %v1787 = vpack.c.b16 %v1414, %v1413
    %v1788 = vpack.c.b16 %v1416, %v1415
    %v1789 = vpack.c.b16 %v1418, %v1417
    %v1790 = vpack.c.b16 %v1420, %v1419
    %v1791 = vpack.c.b16 %v1422, %v1421
    %v1792 = vpack.c.b16 %v1424, %v1423
    %v1793 = vpack.c.b16 %v1426, %v1425
    %v1794 = vpack.c.b16 %v1428, %v1427
    %v1795 = vpack.c.b16 %v1430, %v1429
    %v1796 = vpack.c.b16 %v1432, %v1431
    %v1797 = vpack.c.b16 %v1434, %v1433
    %v1798 = vpack.c.b16 %v1436, %v1435
    %v1799 = vpack.c.b16 %v1438, %v1437
    %v1800 = vpack.c.b16 %v1440, %v1439
    %v1801 = vpack.c.b16 %v1442, %v1441
    %v1802 = vpack.c.b16 %v1444, %v1443
    %v1803 = vpack.c.b16 %v1446, %v1445
    %v1804 = vpack.c.b16 %v1448, %v1447
    %v1805 = vpack.c.b16 %v1450, %v1449
    %v1806 = vpack.c.b16 %v1452, %v1451
    %v1807 = vpack.c.b16 %v1454, %v1453
    %v1808 = vpack.c.b16 %v1456, %v1455
    %v1809 = vpack.c.b16 %v1458, %v1457
    %v1810 = vpack.c.b16 %v1460, %v1459
    %v1811 = vpack.c.b16 %v1462, %v1461
    %v1812 = vpack.c.b16 %v1464, %v1463
    %v1813 = vpack.c.b16 %v1466, %v1465
    %v1814 = vpack.c.b16 %v1468, %v1467
    %v1815 = vpack.c.b16 %v1470, %v1469
    %v1816 = vpack.c.b16 %v1472, %v1471
    %v1817 = vpack.c.b16 %v1474, %v1473
    %v1818 = vpack.c.b16 %v1476, %v1475
    %v1819 = vpack.c.b16 %v1478, %v1477
    %v1820 = vpack.c.b16 %v1480, %v1479
    %v1821 = vpack.c.b16 %v1482, %v1481
    %v1822 = vpack.c.b16 %v1484, %v1483
    %v1823 = vpack.c.b16 %v1486, %v1485
    %v1824 = vpack.c.b16 %v1488, %v1487
    %v1825 = vpack.c.b16 %v1490, %v1489
    %v1826 = vpack.c.b16 %v1492, %v1491
    %v1827 = vpack.c.b16 %v1494, %v1493
    %v1828 = vpack.c.b16 %v1496, %v1495
    %v1829 = vpack.c.b16 %v1498, %v1497
    %v1830 = vpack.c.b16 %v1500, %v1499
    %v1831 = vpack.c.b16 %v1502, %v1501
    %v1832 = vpack.c.b16 %v1504, %v1503
    %v1833 = vpack.c.b16 %v1506, %v1505
    %v1834 = vpack.c.b16 %v1508, %v1507
    %v1835 = vpack.c.b16 %v1510, %v1509
    %v1836 = vpack.c.b16 %v1512, %v1511
    %v1837 = vpack.c.b16 %v1514, %v1513
    %v1838 = vpack.c.b16 %v1516, %v1515
    %v1839 = vpack.c.b16 %v1518, %v1517
    %v1840 = vpack.c.b16 %v1520, %v1519
    %v1841 = vpack.c.b16 %v1522, %v1521
    %v1842 = vpack.c.b16 %v1524, %v1523
    %v1843 = vpack.c.b16 %v1526, %v1525
    %v1844 = vpack.c.b16 %v1528, %v1527
    %v1845 = vpack.c.b16 %v1530, %v1529
    %v1846 = vpack.c.b16 %v1532, %v1531
    %v1847 = vpack.c.b16 %v1534, %v1533
    %v1848 = vpack.c.b16 %v1536, %v1535
    %v1849 = vpack.c.b16 %v1538, %v1537
    %v1850 = vpack.c.b16 %v1540, %v1539
    %v1851 = vpack.c.b16 %v1542, %v1541
    %v1852 = vpack.c.b16 %v1544, %v1543
    %v1853 = vpack.c.b16 %v1546, %v1545
    %v1854 = vpack.c.b16 %v1548, %v1547
    %v1855 = vpack.c.b16 %v1550, %v1549
    %v1856 = vpack.c.b16 %v1552, %v1551
    %v1857 = vpack.c.b16 %v1554, %v1553
    %v1858 = vpack.c.b16 %v1556, %v1555
    %v1859 = vpack.c.b16 %v1558, %v1557
    %v1860 = vpack.c.b16 %v1560, %v1559
    %v1861 = vpack.c.b16 %v1562, %v1561
    %v1862 = vpack.c.b16 %v1564, %v1563
    %v1863 = vpack.c.b16 %v1566, %v1565
    %v1864 = vpack.c.b16 %v1568, %v1567
    %v1865 = vpack.c.b16 %v1570, %v1569
    %v1866 = vpack.c.b16 %v1572, %v1571
    %v1867 = vpack.c.b16 %v1574, %v1573
    %v1868 = vpack.c.b16 %v1576, %v1575
    %v1869 = vpack.c.b16 %v1578, %v1577
    %v1870 = vpack.c.b16 %v1580, %v1579
    %v1871 = vpack.c.b16 %v1582, %v1581
    %v1872 = vpack.c.b16 %v1584, %v1583
    %v1873 = vpack.c.b16 %v1586, %v1585
    %v1874 = vpack.c.b16 %v1588, %v1587
    %v1875 = vpack.c.b16 %v1590, %v1589
    %v1876 = vpack.c.b16 %v1592, %v1591
    %v1877 = vpack.c.b16 %v1594, %v1593
    %v1878 = vpack.c.b16 %v1596, %v1595
    %v1879 = vpack.c.b16 %v1598, %v1597
    %v1880 = vpack.c.b16 %v1600, %v1599
    %v1881 = vpack.c.b16 %v1602, %v1601
    %v1882 = vpack.c.b16 %v1604, %v1603
    %v1883 = vpack.c.b16 %v1606, %v1605
    %v1884 = vpack.c.b16 %v1608, %v1607
    %v1885 = vpack.c.b16 %v1610, %v1609
    %v1886 = vpack.c.b16 %v1612, %v1611
    %v1887 = vpack.c.b16 %v1614, %v1613
    %v1888 = vpack.c.b16 %v1616, %v1615
    %v1889 = vpack.c.b16 %v1618, %v1617
    %v1890 = vpack.c.b16 %v1620, %v1619
    %v1891 = vpack.c.b16 %v1622, %v1621
    %v1892 = vpack.c.b16 %v1624, %v1623
    %v1893 = vpack.c.b16 %v1626, %v1625
    %v1894 = vpack.c.b16 %v1628, %v1627
    %v1895 = vpack.c.b16 %v1630, %v1629
    %v1896 = vpack.c.b16 %v1632, %v1631
    %v1897 = vpack.c.b16 %v1634, %v1633
    %v1898 = vpack.c.b16 %v1636, %v1635
    %v1899 = vpack.c.b16 %v1638, %v1637
    %v1900 = vpack.c.b16 %v1640, %v1639
    %v1901 = vpack.c.b16 %v1642, %v1641
    %v1902 = vpack.c.b16 %v1644, %v1643
    %v1903 = vpack.c.b16 %v1646, %v1645
    %v1904 = vpack.c.b16 %v1648, %v1647
    %2161 = vmatpush.bf16.msra.mxu0 %v1656
    %2162 = vmatpush.bf16.msra.mxu0 %v1655
    %2163 = vmatpush.bf16.msra.mxu0 %v1654
    %2164 = vmatpush.bf16.msra.mxu0 %v1653
    %2165 = vmatpush.bf16.msra.mxu0 %v1652
    %2166 = vmatpush.bf16.msra.mxu0 %v1651
    %2167 = vmatpush.bf16.msra.mxu0 %v1650
    %2168 = vmatpush.bf16.msra.mxu0 %v1649
    %2169 = vmatmul.bf16.gmra.mxu0 %v77
    %v2170 = vpop.f32.mrf.mxu0
    %v2171 = vadd.f32 %v623, %v2170
    %v2172 = vpop.f32.mrf.mxu0
    %2173 = vdwg.mxu0
    %2174 = vmatpush.bf16.msra.mxu0 %v1664
    %2175 = vmatpush.bf16.msra.mxu0 %v1663
    %2176 = vmatpush.bf16.msra.mxu0 %v1662
    %2177 = vmatpush.bf16.msra.mxu0 %v1661
    %2178 = vmatpush.bf16.msra.mxu0 %v1660
    %2179 = vmatpush.bf16.msra.mxu0 %v1659
    %2180 = vmatpush.bf16.msra.mxu0 %v1658
    %2181 = vmatpush.bf16.msra.mxu0 %v1657
    %2182 = vmatmul.bf16.gmra.mxu0 %v78
    %v2183 = vpop.f32.mrf.mxu0
    %v2184 = vadd.f32 %v2171, %v2183
    %v2185 = vpop.f32.mrf.mxu0
    %2186 = vdwg.mxu0
    %2187 = vmatpush.bf16.msra.mxu0 %v1672
    %2188 = vmatpush.bf16.msra.mxu0 %v1671
    %2189 = vmatpush.bf16.msra.mxu0 %v1670
    %2190 = vmatpush.bf16.msra.mxu0 %v1669
    %2191 = vmatpush.bf16.msra.mxu0 %v1668
    %2192 = vmatpush.bf16.msra.mxu0 %v1667
    %2193 = vmatpush.bf16.msra.mxu0 %v1666
    %2194 = vmatpush.bf16.msra.mxu0 %v1665
    %2195 = vmatmul.bf16.gmra.mxu0 %v79
    %v2196 = vpop.f32.mrf.mxu0
    %v2197 = vadd.f32 %v2184, %v2196
    %v2198 = vpop.f32.mrf.mxu0
    %2199 = vdwg.mxu0
    %2200 = vmatpush.bf16.msra.mxu0 %v1680
    %2201 = vmatpush.bf16.msra.mxu0 %v1679
    %2202 = vmatpush.bf16.msra.mxu0 %v1678
    %2203 = vmatpush.bf16.msra.mxu0 %v1677
    %2204 = vmatpush.bf16.msra.mxu0 %v1676
    %2205 = vmatpush.bf16.msra.mxu0 %v1675
    %2206 = vmatpush.bf16.msra.mxu0 %v1674
    %2207 = vmatpush.bf16.msra.mxu0 %v1673
    %2208 = vmatmul.bf16.gmra.mxu0 %v80
    %v2209 = vpop.f32.mrf.mxu0
    %v2210 = vadd.f32 %v2197, %v2209
    %v2211 = vpop.f32.mrf.mxu0
    %2212 = vdwg.mxu0
    %2213 = vmatpush.bf16.msra.mxu0 %v1688
    %2214 = vmatpush.bf16.msra.mxu0 %v1687
    %2215 = vmatpush.bf16.msra.mxu0 %v1686
    %2216 = vmatpush.bf16.msra.mxu0 %v1685
    %2217 = vmatpush.bf16.msra.mxu0 %v1684
    %2218 = vmatpush.bf16.msra.mxu0 %v1683
    %2219 = vmatpush.bf16.msra.mxu0 %v1682
    %2220 = vmatpush.bf16.msra.mxu0 %v1681
    %2221 = vmatmul.bf16.gmra.mxu0 %v81
    %v2222 = vpop.f32.mrf.mxu0
    %v2223 = vadd.f32 %v2210, %v2222
    %v2224 = vpop.f32.mrf.mxu0
    %2225 = vdwg.mxu0
    %2226 = vmatpush.bf16.msra.mxu0 %v1696
    %2227 = vmatpush.bf16.msra.mxu0 %v1695
    %2228 = vmatpush.bf16.msra.mxu0 %v1694
    %2229 = vmatpush.bf16.msra.mxu0 %v1693
    %2230 = vmatpush.bf16.msra.mxu0 %v1692
    %2231 = vmatpush.bf16.msra.mxu0 %v1691
    %2232 = vmatpush.bf16.msra.mxu0 %v1690
    %2233 = vmatpush.bf16.msra.mxu0 %v1689
    %2234 = vmatmul.bf16.gmra.mxu0 %v82
    %v2235 = vpop.f32.mrf.mxu0
    %v2236 = vadd.f32 %v2223, %v2235
    %v2237 = vpop.f32.mrf.mxu0
    %2238 = vdwg.mxu0
    %2239 = vmatpush.bf16.msra.mxu0 %v1704
    %2240 = vmatpush.bf16.msra.mxu0 %v1703
    %2241 = vmatpush.bf16.msra.mxu0 %v1702
    %2242 = vmatpush.bf16.msra.mxu0 %v1701
    %2243 = vmatpush.bf16.msra.mxu0 %v1700
    %2244 = vmatpush.bf16.msra.mxu0 %v1699
    %2245 = vmatpush.bf16.msra.mxu0 %v1698
    %2246 = vmatpush.bf16.msra.mxu0 %v1697
    %2247 = vmatmul.bf16.gmra.mxu0 %v83
    %v2248 = vpop.f32.mrf.mxu0
    %v2249 = vadd.f32 %v2236, %v2248
    %v2250 = vpop.f32.mrf.mxu0
    %2251 = vdwg.mxu0
    %2252 = vmatpush.bf16.msra.mxu0 %v1712
    %2253 = vmatpush.bf16.msra.mxu0 %v1711
    %2254 = vmatpush.bf16.msra.mxu0 %v1710
    %2255 = vmatpush.bf16.msra.mxu0 %v1709
    %2256 = vmatpush.bf16.msra.mxu0 %v1708
    %2257 = vmatpush.bf16.msra.mxu0 %v1707
    %2258 = vmatpush.bf16.msra.mxu0 %v1706
    %2259 = vmatpush.bf16.msra.mxu0 %v1705
    %2260 = vmatmul.bf16.gmra.mxu0 %v84
    %v2261 = vpop.f32.mrf.mxu0
    %v2262 = vadd.f32 %v2249, %v2261
    %v2263 = vpop.f32.mrf.mxu0
    %2264 = vdwg.mxu0
    %2265 = vmatpush.bf16.msra.mxu0 %v1720
    %2266 = vmatpush.bf16.msra.mxu0 %v1719
    %2267 = vmatpush.bf16.msra.mxu0 %v1718
    %2268 = vmatpush.bf16.msra.mxu0 %v1717
    %2269 = vmatpush.bf16.msra.mxu0 %v1716
    %2270 = vmatpush.bf16.msra.mxu0 %v1715
    %2271 = vmatpush.bf16.msra.mxu0 %v1714
    %2272 = vmatpush.bf16.msra.mxu0 %v1713
    %2273 = vmatmul.bf16.gmra.mxu0 %v85
    %v2274 = vpop.f32.mrf.mxu0
    %v2275 = vadd.f32 %v2262, %v2274
    %v2276 = vpop.f32.mrf.mxu0
    %2277 = vdwg.mxu0
    %2278 = vmatpush.bf16.msra.mxu0 %v1728
    %2279 = vmatpush.bf16.msra.mxu0 %v1727
    %2280 = vmatpush.bf16.msra.mxu0 %v1726
    %2281 = vmatpush.bf16.msra.mxu0 %v1725
    %2282 = vmatpush.bf16.msra.mxu0 %v1724
    %2283 = vmatpush.bf16.msra.mxu0 %v1723
    %2284 = vmatpush.bf16.msra.mxu0 %v1722
    %2285 = vmatpush.bf16.msra.mxu0 %v1721
    %2286 = vmatmul.bf16.gmra.mxu0 %v86
    %v2287 = vpop.f32.mrf.mxu0
    %v2288 = vadd.f32 %v2275, %v2287
    %v2289 = vpop.f32.mrf.mxu0
    %2290 = vdwg.mxu0
    %2291 = vmatpush.bf16.msra.mxu0 %v1736
    %2292 = vmatpush.bf16.msra.mxu0 %v1735
    %2293 = vmatpush.bf16.msra.mxu0 %v1734
    %2294 = vmatpush.bf16.msra.mxu0 %v1733
    %2295 = vmatpush.bf16.msra.mxu0 %v1732
    %2296 = vmatpush.bf16.msra.mxu0 %v1731
    %2297 = vmatpush.bf16.msra.mxu0 %v1730
    %2298 = vmatpush.bf16.msra.mxu0 %v1729
    %2299 = vmatmul.bf16.gmra.mxu0 %v87
    %v2300 = vpop.f32.mrf.mxu0
    %v2301 = vadd.f32 %v2288, %v2300
    %v2302 = vpop.f32.mrf.mxu0
    %2303 = vdwg.mxu0
    %2304 = vmatpush.bf16.msra.mxu0 %v1744
    %2305 = vmatpush.bf16.msra.mxu0 %v1743
    %2306 = vmatpush.bf16.msra.mxu0 %v1742
    %2307 = vmatpush.bf16.msra.mxu0 %v1741
    %2308 = vmatpush.bf16.msra.mxu0 %v1740
    %2309 = vmatpush.bf16.msra.mxu0 %v1739
    %2310 = vmatpush.bf16.msra.mxu0 %v1738
    %2311 = vmatpush.bf16.msra.mxu0 %v1737
    %2312 = vmatmul.bf16.gmra.mxu0 %v88
    %v2313 = vpop.f32.mrf.mxu0
    %v2314 = vadd.f32 %v2301, %v2313
    %v2315 = vpop.f32.mrf.mxu0
    %2316 = vdwg.mxu0
    %2317 = vmatpush.bf16.msra.mxu0 %v1752
    %2318 = vmatpush.bf16.msra.mxu0 %v1751
    %2319 = vmatpush.bf16.msra.mxu0 %v1750
    %2320 = vmatpush.bf16.msra.mxu0 %v1749
    %2321 = vmatpush.bf16.msra.mxu0 %v1748
    %2322 = vmatpush.bf16.msra.mxu0 %v1747
    %2323 = vmatpush.bf16.msra.mxu0 %v1746
    %2324 = vmatpush.bf16.msra.mxu0 %v1745
    %2325 = vmatmul.bf16.gmra.mxu0 %v89
    %v2326 = vpop.f32.mrf.mxu0
    %v2327 = vadd.f32 %v2314, %v2326
    %v2328 = vpop.f32.mrf.mxu0
    %2329 = vdwg.mxu0
    %2330 = vmatpush.bf16.msra.mxu0 %v1760
    %2331 = vmatpush.bf16.msra.mxu0 %v1759
    %2332 = vmatpush.bf16.msra.mxu0 %v1758
    %2333 = vmatpush.bf16.msra.mxu0 %v1757
    %2334 = vmatpush.bf16.msra.mxu0 %v1756
    %2335 = vmatpush.bf16.msra.mxu0 %v1755
    %2336 = vmatpush.bf16.msra.mxu0 %v1754
    %2337 = vmatpush.bf16.msra.mxu0 %v1753
    %2338 = vmatmul.bf16.gmra.mxu0 %v90
    %v2339 = vpop.f32.mrf.mxu0
    %v2340 = vadd.f32 %v2327, %v2339
    %v2341 = vpop.f32.mrf.mxu0
    %2342 = vdwg.mxu0
    %2343 = vmatpush.bf16.msra.mxu0 %v1768
    %2344 = vmatpush.bf16.msra.mxu0 %v1767
    %2345 = vmatpush.bf16.msra.mxu0 %v1766
    %2346 = vmatpush.bf16.msra.mxu0 %v1765
    %2347 = vmatpush.bf16.msra.mxu0 %v1764
    %2348 = vmatpush.bf16.msra.mxu0 %v1763
    %2349 = vmatpush.bf16.msra.mxu0 %v1762
    %2350 = vmatpush.bf16.msra.mxu0 %v1761
    %2351 = vmatmul.bf16.gmra.mxu0 %v91
    %v2352 = vpop.f32.mrf.mxu0
    %v2353 = vadd.f32 %v2340, %v2352
    %v2354 = vpop.f32.mrf.mxu0
    %2355 = vdwg.mxu0
    %2356 = vmatpush.bf16.msra.mxu0 %v1776
    %2357 = vmatpush.bf16.msra.mxu0 %v1775
    %2358 = vmatpush.bf16.msra.mxu0 %v1774
    %2359 = vmatpush.bf16.msra.mxu0 %v1773
    %2360 = vmatpush.bf16.msra.mxu0 %v1772
    %2361 = vmatpush.bf16.msra.mxu0 %v1771
    %2362 = vmatpush.bf16.msra.mxu0 %v1770
    %2363 = vmatpush.bf16.msra.mxu0 %v1769
    %2364 = vmatmul.bf16.gmra.mxu0 %v92
    %v2365 = vpop.f32.mrf.mxu0
    %v2366 = vadd.f32 %v2353, %v2365
    %v2367 = vpop.f32.mrf.mxu0
    %2368 = vdwg.mxu0
    %2369 = vmatpush.bf16.msra.mxu0 %v1784
    %2370 = vmatpush.bf16.msra.mxu0 %v1783
    %2371 = vmatpush.bf16.msra.mxu0 %v1782
    %2372 = vmatpush.bf16.msra.mxu0 %v1781
    %2373 = vmatpush.bf16.msra.mxu0 %v1780
    %2374 = vmatpush.bf16.msra.mxu0 %v1779
    %2375 = vmatpush.bf16.msra.mxu0 %v1778
    %2376 = vmatpush.bf16.msra.mxu0 %v1777
    %2377 = vmatmul.bf16.gmra.mxu0 %v93
    %v2378 = vpop.f32.mrf.mxu0
    %v2379 = vadd.f32 %v2366, %v2378
    %v2380 = vpop.f32.mrf.mxu0
    %2381 = vdwg.mxu0
    %2382 = vmatpush.bf16.msra.mxu0 %v1792
    %2383 = vmatpush.bf16.msra.mxu0 %v1791
    %2384 = vmatpush.bf16.msra.mxu0 %v1790
    %2385 = vmatpush.bf16.msra.mxu0 %v1789
    %2386 = vmatpush.bf16.msra.mxu0 %v1788
    %2387 = vmatpush.bf16.msra.mxu0 %v1787
    %2388 = vmatpush.bf16.msra.mxu0 %v1786
    %2389 = vmatpush.bf16.msra.mxu0 %v1785
    %2390 = vmatmul.bf16.gmra.mxu0 %v94
    %v2391 = vpop.f32.mrf.mxu0
    %v2392 = vadd.f32 %v2379, %v2391
    %v2393 = vpop.f32.mrf.mxu0
    %2394 = vdwg.mxu0
    %2395 = vmatpush.bf16.msra.mxu0 %v1800
    %2396 = vmatpush.bf16.msra.mxu0 %v1799
    %2397 = vmatpush.bf16.msra.mxu0 %v1798
    %2398 = vmatpush.bf16.msra.mxu0 %v1797
    %2399 = vmatpush.bf16.msra.mxu0 %v1796
    %2400 = vmatpush.bf16.msra.mxu0 %v1795
    %2401 = vmatpush.bf16.msra.mxu0 %v1794
    %2402 = vmatpush.bf16.msra.mxu0 %v1793
    %2403 = vmatmul.bf16.gmra.mxu0 %v95
    %v2404 = vpop.f32.mrf.mxu0
    %v2405 = vadd.f32 %v2392, %v2404
    %v2406 = vpop.f32.mrf.mxu0
    %2407 = vdwg.mxu0
    %2408 = vmatpush.bf16.msra.mxu0 %v1808
    %2409 = vmatpush.bf16.msra.mxu0 %v1807
    %2410 = vmatpush.bf16.msra.mxu0 %v1806
    %2411 = vmatpush.bf16.msra.mxu0 %v1805
    %2412 = vmatpush.bf16.msra.mxu0 %v1804
    %2413 = vmatpush.bf16.msra.mxu0 %v1803
    %2414 = vmatpush.bf16.msra.mxu0 %v1802
    %2415 = vmatpush.bf16.msra.mxu0 %v1801
    %2416 = vmatmul.bf16.gmra.mxu0 %v96
    %v2417 = vpop.f32.mrf.mxu0
    %v2418 = vadd.f32 %v2405, %v2417
    %v2419 = vpop.f32.mrf.mxu0
    %2420 = vdwg.mxu0
    %2421 = vmatpush.bf16.msra.mxu0 %v1816
    %2422 = vmatpush.bf16.msra.mxu0 %v1815
    %2423 = vmatpush.bf16.msra.mxu0 %v1814
    %2424 = vmatpush.bf16.msra.mxu0 %v1813
    %2425 = vmatpush.bf16.msra.mxu0 %v1812
    %2426 = vmatpush.bf16.msra.mxu0 %v1811
    %2427 = vmatpush.bf16.msra.mxu0 %v1810
    %2428 = vmatpush.bf16.msra.mxu0 %v1809
    %2429 = vmatmul.bf16.gmra.mxu0 %v97
    %v2430 = vpop.f32.mrf.mxu0
    %v2431 = vadd.f32 %v2418, %v2430
    %v2432 = vpop.f32.mrf.mxu0
    %2433 = vdwg.mxu0
    %2434 = vmatpush.bf16.msra.mxu0 %v1824
    %2435 = vmatpush.bf16.msra.mxu0 %v1823
    %2436 = vmatpush.bf16.msra.mxu0 %v1822
    %2437 = vmatpush.bf16.msra.mxu0 %v1821
    %2438 = vmatpush.bf16.msra.mxu0 %v1820
    %2439 = vmatpush.bf16.msra.mxu0 %v1819
    %2440 = vmatpush.bf16.msra.mxu0 %v1818
    %2441 = vmatpush.bf16.msra.mxu0 %v1817
    %2442 = vmatmul.bf16.gmra.mxu0 %v98
    %v2443 = vpop.f32.mrf.mxu0
    %v2444 = vadd.f32 %v2431, %v2443
    %v2445 = vpop.f32.mrf.mxu0
    %2446 = vdwg.mxu0
    %2447 = vmatpush.bf16.msra.mxu0 %v1832
    %2448 = vmatpush.bf16.msra.mxu0 %v1831
    %2449 = vmatpush.bf16.msra.mxu0 %v1830
    %2450 = vmatpush.bf16.msra.mxu0 %v1829
    %2451 = vmatpush.bf16.msra.mxu0 %v1828
    %2452 = vmatpush.bf16.msra.mxu0 %v1827
    %2453 = vmatpush.bf16.msra.mxu0 %v1826
    %2454 = vmatpush.bf16.msra.mxu0 %v1825
    %2455 = vmatmul.bf16.gmra.mxu0 %v99
    %v2456 = vpop.f32.mrf.mxu0
    %v2457 = vadd.f32 %v2444, %v2456
    %v2458 = vpop.f32.mrf.mxu0
    %2459 = vdwg.mxu0
    %2460 = vmatpush.bf16.msra.mxu0 %v1840
    %2461 = vmatpush.bf16.msra.mxu0 %v1839
    %2462 = vmatpush.bf16.msra.mxu0 %v1838
    %2463 = vmatpush.bf16.msra.mxu0 %v1837
    %2464 = vmatpush.bf16.msra.mxu0 %v1836
    %2465 = vmatpush.bf16.msra.mxu0 %v1835
    %2466 = vmatpush.bf16.msra.mxu0 %v1834
    %2467 = vmatpush.bf16.msra.mxu0 %v1833
    %2468 = vmatmul.bf16.gmra.mxu0 %v100
    %v2469 = vpop.f32.mrf.mxu0
    %v2470 = vadd.f32 %v2457, %v2469
    %v2471 = vpop.f32.mrf.mxu0
    %2472 = vdwg.mxu0
    %2473 = vmatpush.bf16.msra.mxu0 %v1848
    %2474 = vmatpush.bf16.msra.mxu0 %v1847
    %2475 = vmatpush.bf16.msra.mxu0 %v1846
    %2476 = vmatpush.bf16.msra.mxu0 %v1845
    %2477 = vmatpush.bf16.msra.mxu0 %v1844
    %2478 = vmatpush.bf16.msra.mxu0 %v1843
    %2479 = vmatpush.bf16.msra.mxu0 %v1842
    %2480 = vmatpush.bf16.msra.mxu0 %v1841
    %2481 = vmatmul.bf16.gmra.mxu0 %v101
    %v2482 = vpop.f32.mrf.mxu0
    %v2483 = vadd.f32 %v2470, %v2482
    %v2484 = vpop.f32.mrf.mxu0
    %2485 = vdwg.mxu0
    %2486 = vmatpush.bf16.msra.mxu0 %v1856
    %2487 = vmatpush.bf16.msra.mxu0 %v1855
    %2488 = vmatpush.bf16.msra.mxu0 %v1854
    %2489 = vmatpush.bf16.msra.mxu0 %v1853
    %2490 = vmatpush.bf16.msra.mxu0 %v1852
    %2491 = vmatpush.bf16.msra.mxu0 %v1851
    %2492 = vmatpush.bf16.msra.mxu0 %v1850
    %2493 = vmatpush.bf16.msra.mxu0 %v1849
    %2494 = vmatmul.bf16.gmra.mxu0 %v102
    %v2495 = vpop.f32.mrf.mxu0
    %v2496 = vadd.f32 %v2483, %v2495
    %v2497 = vpop.f32.mrf.mxu0
    %2498 = vdwg.mxu0
    %2499 = vmatpush.bf16.msra.mxu0 %v1864
    %2500 = vmatpush.bf16.msra.mxu0 %v1863
    %2501 = vmatpush.bf16.msra.mxu0 %v1862
    %2502 = vmatpush.bf16.msra.mxu0 %v1861
    %2503 = vmatpush.bf16.msra.mxu0 %v1860
    %2504 = vmatpush.bf16.msra.mxu0 %v1859
    %2505 = vmatpush.bf16.msra.mxu0 %v1858
    %2506 = vmatpush.bf16.msra.mxu0 %v1857
    %2507 = vmatmul.bf16.gmra.mxu0 %v103
    %v2508 = vpop.f32.mrf.mxu0
    %v2509 = vadd.f32 %v2496, %v2508
    %v2510 = vpop.f32.mrf.mxu0
    %2511 = vdwg.mxu0
    %2512 = vmatpush.bf16.msra.mxu0 %v1872
    %2513 = vmatpush.bf16.msra.mxu0 %v1871
    %2514 = vmatpush.bf16.msra.mxu0 %v1870
    %2515 = vmatpush.bf16.msra.mxu0 %v1869
    %2516 = vmatpush.bf16.msra.mxu0 %v1868
    %2517 = vmatpush.bf16.msra.mxu0 %v1867
    %2518 = vmatpush.bf16.msra.mxu0 %v1866
    %2519 = vmatpush.bf16.msra.mxu0 %v1865
    %2520 = vmatmul.bf16.gmra.mxu0 %v104
    %v2521 = vpop.f32.mrf.mxu0
    %v2522 = vadd.f32 %v2509, %v2521
    %v2523 = vpop.f32.mrf.mxu0
    %2524 = vdwg.mxu0
    %2525 = vmatpush.bf16.msra.mxu0 %v1880
    %2526 = vmatpush.bf16.msra.mxu0 %v1879
    %2527 = vmatpush.bf16.msra.mxu0 %v1878
    %2528 = vmatpush.bf16.msra.mxu0 %v1877
    %2529 = vmatpush.bf16.msra.mxu0 %v1876
    %2530 = vmatpush.bf16.msra.mxu0 %v1875
    %2531 = vmatpush.bf16.msra.mxu0 %v1874
    %2532 = vmatpush.bf16.msra.mxu0 %v1873
    %2533 = vmatmul.bf16.gmra.mxu0 %v105
    %v2534 = vpop.f32.mrf.mxu0
    %v2535 = vadd.f32 %v2522, %v2534
    %v2536 = vpop.f32.mrf.mxu0
    %2537 = vdwg.mxu0
    %2538 = vmatpush.bf16.msra.mxu0 %v1888
    %2539 = vmatpush.bf16.msra.mxu0 %v1887
    %2540 = vmatpush.bf16.msra.mxu0 %v1886
    %2541 = vmatpush.bf16.msra.mxu0 %v1885
    %2542 = vmatpush.bf16.msra.mxu0 %v1884
    %2543 = vmatpush.bf16.msra.mxu0 %v1883
    %2544 = vmatpush.bf16.msra.mxu0 %v1882
    %2545 = vmatpush.bf16.msra.mxu0 %v1881
    %2546 = vmatmul.bf16.gmra.mxu0 %v106
    %v2547 = vpop.f32.mrf.mxu0
    %v2548 = vadd.f32 %v2535, %v2547
    %v2549 = vpop.f32.mrf.mxu0
    %2550 = vdwg.mxu0
    %2551 = vmatpush.bf16.msra.mxu0 %v1896
    %2552 = vmatpush.bf16.msra.mxu0 %v1895
    %2553 = vmatpush.bf16.msra.mxu0 %v1894
    %2554 = vmatpush.bf16.msra.mxu0 %v1893
    %2555 = vmatpush.bf16.msra.mxu0 %v1892
    %2556 = vmatpush.bf16.msra.mxu0 %v1891
    %2557 = vmatpush.bf16.msra.mxu0 %v1890
    %2558 = vmatpush.bf16.msra.mxu0 %v1889
    %2559 = vmatmul.bf16.gmra.mxu0 %v107
    %v2560 = vpop.f32.mrf.mxu0
    %v2561 = vadd.f32 %v2548, %v2560
    %v2562 = vpop.f32.mrf.mxu0
    %2563 = vdwg.mxu0
    %2564 = vmatpush.bf16.msra.mxu0 %v1904
    %2565 = vmatpush.bf16.msra.mxu0 %v1903
    %2566 = vmatpush.bf16.msra.mxu0 %v1902
    %2567 = vmatpush.bf16.msra.mxu0 %v1901
    %2568 = vmatpush.bf16.msra.mxu0 %v1900
    %2569 = vmatpush.bf16.msra.mxu0 %v1899
    %2570 = vmatpush.bf16.msra.mxu0 %v1898
    %2571 = vmatpush.bf16.msra.mxu0 %v1897
    %2572 = vmatmul.bf16.gmra.mxu0 %v108
    %v2573 = vpop.f32.mrf.mxu0
    %v2574 = vadd.f32 %v2561, %v2573
    %v2575 = vpop.f32.mrf.mxu0
    %2576 = vdwg.mxu0
    %2577 = vst [vmem:[#allocation7] sm:$0xff] %v2574
    // Predicated region
    $region22: #{linear_pallas.1} parent=1 // pred_check
      _
    $region23: #{linear_pallas.1} parent=1 // pred_check_branch
      %2579 = sbr.rel (0) target = $region25
    $region24: #{linear_pallas.1} parent=1 // pred_region
      %2581 = vsyncadd [#allocation4], 0
      %s2583 = sshll.u32 [#allocation7], 4
      %s2584 = int_to_ptr.vmem [resolvable:$true] %s2583
      %s2585 = sshll.u32 %s3, 4
      %s2586 = int_to_ptr.hbm [resolvable:$true] %s2585
      %2588 = dma.vmem_to_hbm [thread:$0]  %s2584, 128, %s2586, [#allocation4]
    $region25: #{linear_pallas.1} parent=1 // pred_fallthru
      _
    // Predicated region
    $region26: #{linear_pallas.1} parent=1 // pred_check
      _
    $region27: #{linear_pallas.1} parent=1 // pred_check_branch
      %2590 = sbr.rel (0) target = $region29
    $region28: #{linear_pallas.1} parent=1 // pred_region
      %2592 = dma.done [#allocation4], 128
    $region29: #{linear_pallas.1} parent=1 // pred_fallthru
      _
    %2593 = vsyncpa [#allocation3], 1
    %2594 = vsyncpa [#allocation6], 1
    %2595 = vsyncpa [#allocation4], 1

</llo_original>
